<compile_context>
chip_gen: v7x
topology: tpu7x:2x2x1
jax: 0.10.0
libtpu: 0.0.40
codegen_flags: <defaults>
</compile_context>

<pallas_src>
import jax
import jax.numpy as jnp
import numpy as np
from jax.experimental import pallas as pl
from jax.experimental.pallas import tpu as pltpu

KSIZE = 5    # Conv1d kernel_size
PAD = 1      # Conv1d padding
N_LAYERS = 4


def _conv_relu_max(pad_ref, x_val, w_ref, b_ref, t_in):
    """One Conv1d(k=5, pad=1) + ReLU + max-over-time for a single sentence.

    pad_ref: VMEM scratch, >= (t_in + 2*PAD, c_in); holds the zero-padded input
    x_val:   (t_in, c_in) activation value
    w_ref:   (KSIZE * c_in, c_out) im2col-reshaped weights
    b_ref:   (1, c_out)
    Returns (y, u): y (t_out, c_out) f32 ReLU output, u (1, c_out) f32 time-max.
    """
    c_in = x_val.shape[1]
    t_out = t_in + 2 * PAD - KSIZE + 1  # = t_in - 2

    # Build the padded window in VMEM: zero the two halo rows, store interior.
    zero_row = jnp.zeros((1, c_in), pad_ref.dtype)
    pad_ref[0:PAD, :] = zero_row
    pad_ref[t_in + PAD:t_in + 2 * PAD, :] = zero_row
    pad_ref[PAD:PAD + t_in, :] = x_val.astype(pad_ref.dtype)

    # im2col: (t_out, KSIZE*c_in) -> one MXU matmul instead of 5 per-tap ones.
    lhs = jnp.concatenate(
        [pad_ref[pl.ds(k, t_out), :] for k in range(KSIZE)], axis=1)
    acc = jnp.dot(lhs, w_ref[...], preferred_element_type=jnp.float32)
    y = jnp.maximum(acc + b_ref[...], 0.0)          # f32
    u = jnp.max(y, axis=0, keepdims=True)           # (1, c_out) f32
    return y, u


def _encoder_kernel(x_ref,
                    w1_ref, b1_ref, w2_ref, b2_ref,
                    w3_ref, b3_ref, w4_ref, b4_ref,
                    emb_ref, pad1_ref, pad2_ref):
    """Fused 4-layer conv encoder for one batch tile.

    x_ref:   (BB, T, D)  channels-last sentences
    w*_ref:  (KSIZE*C_in, C_out) im2col weights;  b*_ref: (1, C_out)
    emb_ref: (BB, 4*C_out) output embedding rows (lane-dense)
    pad1_ref:(T+2, D) scratch for the layer-1 padded input
    pad2_ref:(T, C)   scratch for the padded layer-1..3 activations
    """
    bb, t, _ = x_ref.shape
    for i in range(bb):  # static unroll over the (small) batch tile
        x0 = x_ref[i]                                              # (T, D)
        y1, u1 = _conv_relu_max(pad1_ref, x0, w1_ref, b1_ref, t)
        y2, u2 = _conv_relu_max(pad2_ref, y1, w2_ref, b2_ref, t - 2)
        y3, u3 = _conv_relu_max(pad2_ref, y2, w3_ref, b3_ref, t - 4)
        _, u4 = _conv_relu_max(pad2_ref, y3, w4_ref, b4_ref, t - 6)
        emb_ref[i:i + 1, :] = jnp.concatenate(
            [u1, u2, u3, u4], axis=1).astype(emb_ref.dtype)


def conv_encoder(x, params):
    """x: (B, T, D) channels-last input.
    params: list of 4 (w, b), w: (KSIZE, C_in, C_out), b: (C_out,).
    Returns emb: (B, 4 * C_out)."""
    B, T, D = x.shape
    C = params[0][0].shape[2]
    assert T - 2 * N_LAYERS >= 1, "sequence too short for 4 k=5/p=1 convs"

    # Up to 8 sentences per grid step (amortizes ~0.35us per-step overhead).
    BB = B if B <= 8 else 8
    n_tiles = pl.cdiv(B, BB)
    B_pad = n_tiles * BB
    if B_pad != B:
        x = jnp.pad(x, ((0, B_pad - B), (0, 0), (0, 0)))

    flat_inputs = [x]
    in_specs = [pl.BlockSpec((BB, T, D), lambda i: (i, 0, 0))]
    for (w, b) in params:
        k, c_in, c_out = w.shape
        flat_inputs.append(w.reshape(k * c_in, c_out))   # im2col weight layout
        flat_inputs.append(b.reshape(1, c_out))
        in_specs.append(pl.BlockSpec((k * c_in, c_out), lambda i: (0, 0)))
        in_specs.append(pl.BlockSpec((1, c_out), lambda i: (0, 0)))

    emb = pl.pallas_call(
        _encoder_kernel,
        out_shape=jax.ShapeDtypeStruct((B_pad, N_LAYERS * C), x.dtype),
        grid=(n_tiles,),
        in_specs=in_specs,
        out_specs=pl.BlockSpec((BB, N_LAYERS * C), lambda i: (i, 0)),
        scratch_shapes=[
            pltpu.VMEM((T + 2 * PAD, D), x.dtype),   # layer-1 padded input
            pltpu.VMEM((T, C), x.dtype),             # padded layer-1..3 activations
        ],
        compiler_params=pltpu.CompilerParams(
            dimension_semantics=("parallel",)),
    )(*flat_inputs)
    return emb[:B]


def init_params(key, word_emb_dim, enc_lstm_dim, dtype=jnp.float32):
    """Deterministic synthetic weights. Conv weights stored as (K, C_in, C_out)."""
    two_h = 2 * enc_lstm_dim
    dims = [(word_emb_dim, two_h), (two_h, two_h), (two_h, two_h), (two_h, two_h)]
    params = []
    for (c_in, c_out) in dims:
        key, kw, kb = jax.random.split(key, 3)
        scale = 1.0 / np.sqrt(c_in * KSIZE)
        w = (jax.random.normal(kw, (KSIZE, c_in, c_out), dtype) * scale).astype(dtype)
        b = (jax.random.normal(kb, (c_out,), dtype) * scale).astype(dtype)
        params.append((w, b))
    return params


@jax.jit
def convnet_encoder3(sent, params):
    """sent: (T, B, word_emb_dim) -- same axis convention as the PyTorch module.

    sent_len is unused by the PyTorch forward, so it is omitted here.
    Returns emb: (B, 8 * enc_lstm_dim).
    """
    x = jnp.transpose(sent, (1, 0, 2))   # (B, T, D) channels-last
    return conv_encoder(x, params)


def _reference(sent, params):
    """Pure-JAX reference (lax conv) for a correctness check."""
    x = jnp.transpose(sent, (1, 2, 0))  # (B, C, T) = NCW
    us = []
    for (w, b) in params:
        # lax wants OIW weights: (C_out, C_in, K); ours are (K, C_in, C_out).
        w_oiw = jnp.transpose(w, (2, 1, 0))
        y = jax.lax.conv_general_dilated(
            x, w_oiw, window_strides=(1,), padding=[(PAD, PAD)],
            dimension_numbers=("NCW", "OIW", "NCW"))
        y = jax.nn.relu(y + b[None, :, None])
        us.append(jnp.max(y, axis=2))
        x = y
    return jnp.concatenate(us, axis=1)


if __name__ == "__main__":
    # Small synthetic config.
    T, B = 16, 2
    word_emb_dim, enc_lstm_dim = 32, 16  # 2*H = 32, emb dim = 8*H = 128

    key = jax.random.PRNGKey(0)
    key, k_inp = jax.random.split(key)
    sent = jax.random.normal(k_inp, (T, B, word_emb_dim), jnp.float32)
    sent_len = jnp.full((B,), T, jnp.int32)  # unused by forward (parity w/ torch)

    params = init_params(key, word_emb_dim, enc_lstm_dim)

    emb = convnet_encoder3(sent, params)
    emb = jax.block_until_ready(emb)

    assert emb.shape == (B, 8 * enc_lstm_dim), emb.shape

    ref = jax.block_until_ready(_reference(sent, params))
    np.testing.assert_allclose(np.asarray(emb), np.asarray(ref), atol=2e-3, rtol=2e-3)

    print("KERNEL_OK")
</pallas_src>

<mosaic_0001>
module attributes {stable_mosaic.version = 11 : i64} {
  func.func @_encoder_kernel(%arg0: i32, %arg1: memref<2x16x32xf32, #tpu.memory_space<vmem>>, %arg2: memref<160x32xf32, #tpu.memory_space<vmem>>, %arg3: memref<1x32xf32, #tpu.memory_space<vmem>>, %arg4: memref<160x32xf32, #tpu.memory_space<vmem>>, %arg5: memref<1x32xf32, #tpu.memory_space<vmem>>, %arg6: memref<160x32xf32, #tpu.memory_space<vmem>>, %arg7: memref<1x32xf32, #tpu.memory_space<vmem>>, %arg8: memref<160x32xf32, #tpu.memory_space<vmem>>, %arg9: memref<1x32xf32, #tpu.memory_space<vmem>>, %arg10: memref<2x128xf32, #tpu.memory_space<vmem>>, %arg11: memref<18x32xf32, #tpu.memory_space<vmem>>, %arg12: memref<16x32xf32, #tpu.memory_space<vmem>>) attributes {dimension_semantics = [#tpu.dimension_semantics<parallel>], iteration_bounds = array<i64: 1>, scalar_prefetch = 0 : i64, scratch_operands = 2 : i64, tpu.core_type = #tpu.core_type<tc>, window_params = [{transform_indices = @transform_0, window_bounds = array<i64: 2, 16, 32>}, {pipeline_mode = #tpu.pipeline_mode<synchronous>, transform_indices = @transform_1, window_bounds = array<i64: 160, 32>}, {pipeline_mode = #tpu.pipeline_mode<synchronous>, transform_indices = @transform_2, window_bounds = array<i64: 1, 32>}, {pipeline_mode = #tpu.pipeline_mode<synchronous>, transform_indices = @transform_3, window_bounds = array<i64: 160, 32>}, {pipeline_mode = #tpu.pipeline_mode<synchronous>, transform_indices = @transform_4, window_bounds = array<i64: 1, 32>}, {pipeline_mode = #tpu.pipeline_mode<synchronous>, transform_indices = @transform_5, window_bounds = array<i64: 160, 32>}, {pipeline_mode = #tpu.pipeline_mode<synchronous>, transform_indices = @transform_6, window_bounds = array<i64: 1, 32>}, {pipeline_mode = #tpu.pipeline_mode<synchronous>, transform_indices = @transform_7, window_bounds = array<i64: 160, 32>}, {pipeline_mode = #tpu.pipeline_mode<synchronous>, transform_indices = @transform_8, window_bounds = array<i64: 1, 32>}, {transform_indices = @transform_9, window_bounds = array<i64: 2, 128>}]} {
    %c0 = arith.constant 0 : index
    %c0_0 = arith.constant 0 : index
    %c0_1 = arith.constant 0 : index
    %0 = vector.load %arg1[%c0, %c0_0, %c0_1] : memref<2x16x32xf32, #tpu.memory_space<vmem>>, vector<1x16x32xf32>
    %1 = vector.shape_cast %0 : vector<1x16x32xf32> to vector<16x32xf32>
    %cst = arith.constant 0.000000e+00 : f32
    %2 = vector.broadcast %cst : f32 to vector<1x32xf32>
    %c0_2 = arith.constant 0 : index
    %c0_3 = arith.constant 0 : index
    %3 = vector.load %arg11[%c0_2, %c0_3] : memref<18x32xf32, #tpu.memory_space<vmem>>, vector<1x32xf32>
    tpu.vector_store %arg11[%c0_2, %c0_3], %2 {strides = array<i32>} : memref<18x32xf32, #tpu.memory_space<vmem>>, vector<1x32xf32>,
    %c17 = arith.constant 17 : index
    %c0_4 = arith.constant 0 : index
    %4 = vector.load %arg11[%c17, %c0_4] : memref<18x32xf32, #tpu.memory_space<vmem>>, vector<1x32xf32>
    tpu.vector_store %arg11[%c17, %c0_4], %2 {strides = array<i32>} : memref<18x32xf32, #tpu.memory_space<vmem>>, vector<1x32xf32>,
    %c1 = arith.constant 1 : index
    %c0_5 = arith.constant 0 : index
    %5 = vector.load %arg11[%c1, %c0_5] : memref<18x32xf32, #tpu.memory_space<vmem>>, vector<16x32xf32>
    tpu.vector_store %arg11[%c1, %c0_5], %1 {strides = array<i32>} : memref<18x32xf32, #tpu.memory_space<vmem>>, vector<16x32xf32>,
    %c0_6 = arith.constant 0 : index
    %c0_7 = arith.constant 0 : index
    %6 = vector.load %arg11[%c0_6, %c0_7] : memref<18x32xf32, #tpu.memory_space<vmem>>, vector<14x32xf32>
    %c1_8 = arith.constant 1 : index
    %c0_9 = arith.constant 0 : index
    %7 = vector.load %arg11[%c1_8, %c0_9] : memref<18x32xf32, #tpu.memory_space<vmem>>, vector<14x32xf32>
    %c2 = arith.constant 2 : index
    %c0_10 = arith.constant 0 : index
    %8 = vector.load %arg11[%c2, %c0_10] : memref<18x32xf32, #tpu.memory_space<vmem>>, vector<14x32xf32>
    %c3 = arith.constant 3 : index
    %c0_11 = arith.constant 0 : index
    %9 = vector.load %arg11[%c3, %c0_11] : memref<18x32xf32, #tpu.memory_space<vmem>>, vector<14x32xf32>
    %c4 = arith.constant 4 : index
    %c0_12 = arith.constant 0 : index
    %10 = vector.load %arg11[%c4, %c0_12] : memref<18x32xf32, #tpu.memory_space<vmem>>, vector<14x32xf32>
    %11 = tpu.concatenate %6, %7, %8, %9, %10 in 1 : vector<14x32xf32>, vector<14x32xf32>, vector<14x32xf32>, vector<14x32xf32>, vector<14x32xf32> -> vector<14x160xf32>
    %c0_13 = arith.constant 0 : index
    %c0_14 = arith.constant 0 : index
    %12 = vector.load %arg2[%c0_13, %c0_14] : memref<160x32xf32, #tpu.memory_space<vmem>>, vector<160x32xf32>
    %cst_15 = arith.constant dense<0.000000e+00> : vector<14x32xf32>
    %13 = tpu.matmul %11, %12, %cst_15 {dimension_numbers = #tpu.dot_dimension_numbers<[1], [0], [0], [1], [0, 0, 1, 1], [], []>} : vector<14x160xf32>, vector<160x32xf32>, vector<14x32xf32> -> vector<14x32xf32>
    %c0_16 = arith.constant 0 : index
    %c0_17 = arith.constant 0 : index
    %14 = vector.load %arg3[%c0_16, %c0_17] : memref<1x32xf32, #tpu.memory_space<vmem>>, vector<1x32xf32>
    %15 = vector.broadcast %14 : vector<1x32xf32> to vector<14x32xf32>
    %16 = arith.addf %13, %15 : vector<14x32xf32>
    %cst_18 = arith.constant 0.000000e+00 : f32
    %17 = vector.broadcast %cst_18 : f32 to vector<14x32xf32>
    %18 = arith.maximumf %16, %17 : vector<14x32xf32>
    %cst_19 = arith.constant dense<0xFF800000> : vector<32xf32>
    %19 = vector.multi_reduction <maximumf>, %18, %cst_19 [0] : vector<14x32xf32> to vector<32xf32>
    %20 = vector.shape_cast %19 : vector<32xf32> to vector<1x32xf32>
    %cst_20 = arith.constant 0.000000e+00 : f32
    %21 = vector.broadcast %cst_20 : f32 to vector<1x32xf32>
    %c0_21 = arith.constant 0 : index
    %c0_22 = arith.constant 0 : index
    %22 = vector.load %arg12[%c0_21, %c0_22] : memref<16x32xf32, #tpu.memory_space<vmem>>, vector<1x32xf32>
    tpu.vector_store %arg12[%c0_21, %c0_22], %21 {strides = array<i32>} : memref<16x32xf32, #tpu.memory_space<vmem>>, vector<1x32xf32>,
    %c15 = arith.constant 15 : index
    %c0_23 = arith.constant 0 : index
    %23 = vector.load %arg12[%c15, %c0_23] : memref<16x32xf32, #tpu.memory_space<vmem>>, vector<1x32xf32>
    tpu.vector_store %arg12[%c15, %c0_23], %21 {strides = array<i32>} : memref<16x32xf32, #tpu.memory_space<vmem>>, vector<1x32xf32>,
    %c1_24 = arith.constant 1 : index
    %c0_25 = arith.constant 0 : index
    %24 = vector.load %arg12[%c1_24, %c0_25] : memref<16x32xf32, #tpu.memory_space<vmem>>, vector<14x32xf32>
    tpu.vector_store %arg12[%c1_24, %c0_25], %18 {strides = array<i32>} : memref<16x32xf32, #tpu.memory_space<vmem>>, vector<14x32xf32>,
    %c0_26 = arith.constant 0 : index
    %c0_27 = arith.constant 0 : index
    %25 = vector.load %arg12[%c0_26, %c0_27] : memref<16x32xf32, #tpu.memory_space<vmem>>, vector<12x32xf32>
    %c1_28 = arith.constant 1 : index
    %c0_29 = arith.constant 0 : index
    %26 = vector.load %arg12[%c1_28, %c0_29] : memref<16x32xf32, #tpu.memory_space<vmem>>, vector<12x32xf32>
    %c2_30 = arith.constant 2 : index
    %c0_31 = arith.constant 0 : index
    %27 = vector.load %arg12[%c2_30, %c0_31] : memref<16x32xf32, #tpu.memory_space<vmem>>, vector<12x32xf32>
    %c3_32 = arith.constant 3 : index
    %c0_33 = arith.constant 0 : index
    %28 = vector.load %arg12[%c3_32, %c0_33] : memref<16x32xf32, #tpu.memory_space<vmem>>, vector<12x32xf32>
    %c4_34 = arith.constant 4 : index
    %c0_35 = arith.constant 0 : index
    %29 = vector.load %arg12[%c4_34, %c0_35] : memref<16x32xf32, #tpu.memory_space<vmem>>, vector<12x32xf32>
    %30 = tpu.concatenate %25, %26, %27, %28, %29 in 1 : vector<12x32xf32>, vector<12x32xf32>, vector<12x32xf32>, vector<12x32xf32>, vector<12x32xf32> -> vector<12x160xf32>
    %c0_36 = arith.constant 0 : index
    %c0_37 = arith.constant 0 : index
    %31 = vector.load %arg4[%c0_36, %c0_37] : memref<160x32xf32, #tpu.memory_space<vmem>>, vector<160x32xf32>
    %cst_38 = arith.constant dense<0.000000e+00> : vector<12x32xf32>
    %32 = tpu.matmul %30, %31, %cst_38 {dimension_numbers = #tpu.dot_dimension_numbers<[1], [0], [0], [1], [0, 0, 1, 1], [], []>} : vector<12x160xf32>, vector<160x32xf32>, vector<12x32xf32> -> vector<12x32xf32>
    %c0_39 = arith.constant 0 : index
    %c0_40 = arith.constant 0 : index
    %33 = vector.load %arg5[%c0_39, %c0_40] : memref<1x32xf32, #tpu.memory_space<vmem>>, vector<1x32xf32>
    %34 = vector.broadcast %33 : vector<1x32xf32> to vector<12x32xf32>
    %35 = arith.addf %32, %34 : vector<12x32xf32>
    %cst_41 = arith.constant 0.000000e+00 : f32
    %36 = vector.broadcast %cst_41 : f32 to vector<12x32xf32>
    %37 = arith.maximumf %35, %36 : vector<12x32xf32>
    %cst_42 = arith.constant dense<0xFF800000> : vector<32xf32>
    %38 = vector.multi_reduction <maximumf>, %37, %cst_42 [0] : vector<12x32xf32> to vector<32xf32>
    %39 = vector.shape_cast %38 : vector<32xf32> to vector<1x32xf32>
    %cst_43 = arith.constant 0.000000e+00 : f32
    %40 = vector.broadcast %cst_43 : f32 to vector<1x32xf32>
    %c0_44 = arith.constant 0 : index
    %c0_45 = arith.constant 0 : index
    %41 = vector.load %arg12[%c0_44, %c0_45] : memref<16x32xf32, #tpu.memory_space<vmem>>, vector<1x32xf32>
    tpu.vector_store %arg12[%c0_44, %c0_45], %40 {strides = array<i32>} : memref<16x32xf32, #tpu.memory_space<vmem>>, vector<1x32xf32>,
    %c13 = arith.constant 13 : index
    %c0_46 = arith.constant 0 : index
    %42 = vector.load %arg12[%c13, %c0_46] : memref<16x32xf32, #tpu.memory_space<vmem>>, vector<1x32xf32>
    tpu.vector_store %arg12[%c13, %c0_46], %40 {strides = array<i32>} : memref<16x32xf32, #tpu.memory_space<vmem>>, vector<1x32xf32>,
    %c1_47 = arith.constant 1 : index
    %c0_48 = arith.constant 0 : index
    %43 = vector.load %arg12[%c1_47, %c0_48] : memref<16x32xf32, #tpu.memory_space<vmem>>, vector<12x32xf32>
    tpu.vector_store %arg12[%c1_47, %c0_48], %37 {strides = array<i32>} : memref<16x32xf32, #tpu.memory_space<vmem>>, vector<12x32xf32>,
    %c0_49 = arith.constant 0 : index
    %c0_50 = arith.constant 0 : index
    %44 = vector.load %arg12[%c0_49, %c0_50] : memref<16x32xf32, #tpu.memory_space<vmem>>, vector<10x32xf32>
    %c1_51 = arith.constant 1 : index
    %c0_52 = arith.constant 0 : index
    %45 = vector.load %arg12[%c1_51, %c0_52] : memref<16x32xf32, #tpu.memory_space<vmem>>, vector<10x32xf32>
    %c2_53 = arith.constant 2 : index
    %c0_54 = arith.constant 0 : index
    %46 = vector.load %arg12[%c2_53, %c0_54] : memref<16x32xf32, #tpu.memory_space<vmem>>, vector<10x32xf32>
    %c3_55 = arith.constant 3 : index
    %c0_56 = arith.constant 0 : index
    %47 = vector.load %arg12[%c3_55, %c0_56] : memref<16x32xf32, #tpu.memory_space<vmem>>, vector<10x32xf32>
    %c4_57 = arith.constant 4 : index
    %c0_58 = arith.constant 0 : index
    %48 = vector.load %arg12[%c4_57, %c0_58] : memref<16x32xf32, #tpu.memory_space<vmem>>, vector<10x32xf32>
    %49 = tpu.concatenate %44, %45, %46, %47, %48 in 1 : vector<10x32xf32>, vector<10x32xf32>, vector<10x32xf32>, vector<10x32xf32>, vector<10x32xf32> -> vector<10x160xf32>
    %c0_59 = arith.constant 0 : index
    %c0_60 = arith.constant 0 : index
    %50 = vector.load %arg6[%c0_59, %c0_60] : memref<160x32xf32, #tpu.memory_space<vmem>>, vector<160x32xf32>
    %cst_61 = arith.constant dense<0.000000e+00> : vector<10x32xf32>
    %51 = tpu.matmul %49, %50, %cst_61 {dimension_numbers = #tpu.dot_dimension_numbers<[1], [0], [0], [1], [0, 0, 1, 1], [], []>} : vector<10x160xf32>, vector<160x32xf32>, vector<10x32xf32> -> vector<10x32xf32>
    %c0_62 = arith.constant 0 : index
    %c0_63 = arith.constant 0 : index
    %52 = vector.load %arg7[%c0_62, %c0_63] : memref<1x32xf32, #tpu.memory_space<vmem>>, vector<1x32xf32>
    %53 = vector.broadcast %52 : vector<1x32xf32> to vector<10x32xf32>
    %54 = arith.addf %51, %53 : vector<10x32xf32>
    %cst_64 = arith.constant 0.000000e+00 : f32
    %55 = vector.broadcast %cst_64 : f32 to vector<10x32xf32>
    %56 = arith.maximumf %54, %55 : vector<10x32xf32>
    %cst_65 = arith.constant dense<0xFF800000> : vector<32xf32>
    %57 = vector.multi_reduction <maximumf>, %56, %cst_65 [0] : vector<10x32xf32> to vector<32xf32>
    %58 = vector.shape_cast %57 : vector<32xf32> to vector<1x32xf32>
    %cst_66 = arith.constant 0.000000e+00 : f32
    %59 = vector.broadcast %cst_66 : f32 to vector<1x32xf32>
    %c0_67 = arith.constant 0 : index
    %c0_68 = arith.constant 0 : index
    %60 = vector.load %arg12[%c0_67, %c0_68] : memref<16x32xf32, #tpu.memory_space<vmem>>, vector<1x32xf32>
    tpu.vector_store %arg12[%c0_67, %c0_68], %59 {strides = array<i32>} : memref<16x32xf32, #tpu.memory_space<vmem>>, vector<1x32xf32>,
    %c11 = arith.constant 11 : index
    %c0_69 = arith.constant 0 : index
    %61 = vector.load %arg12[%c11, %c0_69] : memref<16x32xf32, #tpu.memory_space<vmem>>, vector<1x32xf32>
    tpu.vector_store %arg12[%c11, %c0_69], %59 {strides = array<i32>} : memref<16x32xf32, #tpu.memory_space<vmem>>, vector<1x32xf32>,
    %c1_70 = arith.constant 1 : index
    %c0_71 = arith.constant 0 : index
    %62 = vector.load %arg12[%c1_70, %c0_71] : memref<16x32xf32, #tpu.memory_space<vmem>>, vector<10x32xf32>
    tpu.vector_store %arg12[%c1_70, %c0_71], %56 {strides = array<i32>} : memref<16x32xf32, #tpu.memory_space<vmem>>, vector<10x32xf32>,
    %c0_72 = arith.constant 0 : index
    %c0_73 = arith.constant 0 : index
    %63 = vector.load %arg12[%c0_72, %c0_73] : memref<16x32xf32, #tpu.memory_space<vmem>>, vector<8x32xf32>
    %c1_74 = arith.constant 1 : index
    %c0_75 = arith.constant 0 : index
    %64 = vector.load %arg12[%c1_74, %c0_75] : memref<16x32xf32, #tpu.memory_space<vmem>>, vector<8x32xf32>
    %c2_76 = arith.constant 2 : index
    %c0_77 = arith.constant 0 : index
    %65 = vector.load %arg12[%c2_76, %c0_77] : memref<16x32xf32, #tpu.memory_space<vmem>>, vector<8x32xf32>
    %c3_78 = arith.constant 3 : index
    %c0_79 = arith.constant 0 : index
    %66 = vector.load %arg12[%c3_78, %c0_79] : memref<16x32xf32, #tpu.memory_space<vmem>>, vector<8x32xf32>
    %c4_80 = arith.constant 4 : index
    %c0_81 = arith.constant 0 : index
    %67 = vector.load %arg12[%c4_80, %c0_81] : memref<16x32xf32, #tpu.memory_space<vmem>>, vector<8x32xf32>
    %68 = tpu.concatenate %63, %64, %65, %66, %67 in 1 : vector<8x32xf32>, vector<8x32xf32>, vector<8x32xf32>, vector<8x32xf32>, vector<8x32xf32> -> vector<8x160xf32>
    %c0_82 = arith.constant 0 : index
    %c0_83 = arith.constant 0 : index
    %69 = vector.load %arg8[%c0_82, %c0_83] : memref<160x32xf32, #tpu.memory_space<vmem>>, vector<160x32xf32>
    %cst_84 = arith.constant dense<0.000000e+00> : vector<8x32xf32>
    %70 = tpu.matmul %68, %69, %cst_84 {dimension_numbers = #tpu.dot_dimension_numbers<[1], [0], [0], [1], [0, 0, 1, 1], [], []>} : vector<8x160xf32>, vector<160x32xf32>, vector<8x32xf32> -> vector<8x32xf32>
    %c0_85 = arith.constant 0 : index
    %c0_86 = arith.constant 0 : index
    %71 = vector.load %arg9[%c0_85, %c0_86] : memref<1x32xf32, #tpu.memory_space<vmem>>, vector<1x32xf32>
    %72 = vector.broadcast %71 : vector<1x32xf32> to vector<8x32xf32>
    %73 = arith.addf %70, %72 : vector<8x32xf32>
    %cst_87 = arith.constant 0.000000e+00 : f32
    %74 = vector.broadcast %cst_87 : f32 to vector<8x32xf32>
    %75 = arith.maximumf %73, %74 : vector<8x32xf32>
    %cst_88 = arith.constant dense<0xFF800000> : vector<32xf32>
    %76 = vector.multi_reduction <maximumf>, %75, %cst_88 [0] : vector<8x32xf32> to vector<32xf32>
    %77 = vector.shape_cast %76 : vector<32xf32> to vector<1x32xf32>
    %78 = tpu.concatenate %20, %39, %58, %77 in 1 : vector<1x32xf32>, vector<1x32xf32>, vector<1x32xf32>, vector<1x32xf32> -> vector<1x128xf32>
    %c0_89 = arith.constant 0 : index
    %c0_90 = arith.constant 0 : index
    %79 = vector.load %arg10[%c0_89, %c0_90] : memref<2x128xf32, #tpu.memory_space<vmem>>, vector<1x128xf32>
    tpu.vector_store %arg10[%c0_89, %c0_90], %78 {strides = array<i32>} : memref<2x128xf32, #tpu.memory_space<vmem>>, vector<1x128xf32>,
    %c1_91 = arith.constant 1 : index
    %c0_92 = arith.constant 0 : index
    %c0_93 = arith.constant 0 : index
    %80 = vector.load %arg1[%c1_91, %c0_92, %c0_93] : memref<2x16x32xf32, #tpu.memory_space<vmem>>, vector<1x16x32xf32>
    %81 = vector.shape_cast %80 : vector<1x16x32xf32> to vector<16x32xf32>
    %cst_94 = arith.constant 0.000000e+00 : f32
    %82 = vector.broadcast %cst_94 : f32 to vector<1x32xf32>
    %c0_95 = arith.constant 0 : index
    %c0_96 = arith.constant 0 : index
    %83 = vector.load %arg11[%c0_95, %c0_96] : memref<18x32xf32, #tpu.memory_space<vmem>>, vector<1x32xf32>
    tpu.vector_store %arg11[%c0_95, %c0_96], %82 {strides = array<i32>} : memref<18x32xf32, #tpu.memory_space<vmem>>, vector<1x32xf32>,
    %c17_97 = arith.constant 17 : index
    %c0_98 = arith.constant 0 : index
    %84 = vector.load %arg11[%c17_97, %c0_98] : memref<18x32xf32, #tpu.memory_space<vmem>>, vector<1x32xf32>
    tpu.vector_store %arg11[%c17_97, %c0_98], %82 {strides = array<i32>} : memref<18x32xf32, #tpu.memory_space<vmem>>, vector<1x32xf32>,
    %c1_99 = arith.constant 1 : index
    %c0_100 = arith.constant 0 : index
    %85 = vector.load %arg11[%c1_99, %c0_100] : memref<18x32xf32, #tpu.memory_space<vmem>>, vector<16x32xf32>
    tpu.vector_store %arg11[%c1_99, %c0_100], %81 {strides = array<i32>} : memref<18x32xf32, #tpu.memory_space<vmem>>, vector<16x32xf32>,
    %c0_101 = arith.constant 0 : index
    %c0_102 = arith.constant 0 : index
    %86 = vector.load %arg11[%c0_101, %c0_102] : memref<18x32xf32, #tpu.memory_space<vmem>>, vector<14x32xf32>
    %c1_103 = arith.constant 1 : index
    %c0_104 = arith.constant 0 : index
    %87 = vector.load %arg11[%c1_103, %c0_104] : memref<18x32xf32, #tpu.memory_space<vmem>>, vector<14x32xf32>
    %c2_105 = arith.constant 2 : index
    %c0_106 = arith.constant 0 : index
    %88 = vector.load %arg11[%c2_105, %c0_106] : memref<18x32xf32, #tpu.memory_space<vmem>>, vector<14x32xf32>
    %c3_107 = arith.constant 3 : index
    %c0_108 = arith.constant 0 : index
    %89 = vector.load %arg11[%c3_107, %c0_108] : memref<18x32xf32, #tpu.memory_space<vmem>>, vector<14x32xf32>
    %c4_109 = arith.constant 4 : index
    %c0_110 = arith.constant 0 : index
    %90 = vector.load %arg11[%c4_109, %c0_110] : memref<18x32xf32, #tpu.memory_space<vmem>>, vector<14x32xf32>
    %91 = tpu.concatenate %86, %87, %88, %89, %90 in 1 : vector<14x32xf32>, vector<14x32xf32>, vector<14x32xf32>, vector<14x32xf32>, vector<14x32xf32> -> vector<14x160xf32>
    %c0_111 = arith.constant 0 : index
    %c0_112 = arith.constant 0 : index
    %92 = vector.load %arg2[%c0_111, %c0_112] : memref<160x32xf32, #tpu.memory_space<vmem>>, vector<160x32xf32>
    %cst_113 = arith.constant dense<0.000000e+00> : vector<14x32xf32>
    %93 = tpu.matmul %91, %92, %cst_113 {dimension_numbers = #tpu.dot_dimension_numbers<[1], [0], [0], [1], [0, 0, 1, 1], [], []>} : vector<14x160xf32>, vector<160x32xf32>, vector<14x32xf32> -> vector<14x32xf32>
    %c0_114 = arith.constant 0 : index
    %c0_115 = arith.constant 0 : index
    %94 = vector.load %arg3[%c0_114, %c0_115] : memref<1x32xf32, #tpu.memory_space<vmem>>, vector<1x32xf32>
    %95 = vector.broadcast %94 : vector<1x32xf32> to vector<14x32xf32>
    %96 = arith.addf %93, %95 : vector<14x32xf32>
    %cst_116 = arith.constant 0.000000e+00 : f32
    %97 = vector.broadcast %cst_116 : f32 to vector<14x32xf32>
    %98 = arith.maximumf %96, %97 : vector<14x32xf32>
    %cst_117 = arith.constant dense<0xFF800000> : vector<32xf32>
    %99 = vector.multi_reduction <maximumf>, %98, %cst_117 [0] : vector<14x32xf32> to vector<32xf32>
    %100 = vector.shape_cast %99 : vector<32xf32> to vector<1x32xf32>
    %cst_118 = arith.constant 0.000000e+00 : f32
    %101 = vector.broadcast %cst_118 : f32 to vector<1x32xf32>
    %c0_119 = arith.constant 0 : index
    %c0_120 = arith.constant 0 : index
    %102 = vector.load %arg12[%c0_119, %c0_120] : memref<16x32xf32, #tpu.memory_space<vmem>>, vector<1x32xf32>
    tpu.vector_store %arg12[%c0_119, %c0_120], %101 {strides = array<i32>} : memref<16x32xf32, #tpu.memory_space<vmem>>, vector<1x32xf32>,
    %c15_121 = arith.constant 15 : index
    %c0_122 = arith.constant 0 : index
    %103 = vector.load %arg12[%c15_121, %c0_122] : memref<16x32xf32, #tpu.memory_space<vmem>>, vector<1x32xf32>
    tpu.vector_store %arg12[%c15_121, %c0_122], %101 {strides = array<i32>} : memref<16x32xf32, #tpu.memory_space<vmem>>, vector<1x32xf32>,
    %c1_123 = arith.constant 1 : index
    %c0_124 = arith.constant 0 : index
    %104 = vector.load %arg12[%c1_123, %c0_124] : memref<16x32xf32, #tpu.memory_space<vmem>>, vector<14x32xf32>
    tpu.vector_store %arg12[%c1_123, %c0_124], %98 {strides = array<i32>} : memref<16x32xf32, #tpu.memory_space<vmem>>, vector<14x32xf32>,
    %c0_125 = arith.constant 0 : index
    %c0_126 = arith.constant 0 : index
    %105 = vector.load %arg12[%c0_125, %c0_126] : memref<16x32xf32, #tpu.memory_space<vmem>>, vector<12x32xf32>
    %c1_127 = arith.constant 1 : index
    %c0_128 = arith.constant 0 : index
    %106 = vector.load %arg12[%c1_127, %c0_128] : memref<16x32xf32, #tpu.memory_space<vmem>>, vector<12x32xf32>
    %c2_129 = arith.constant 2 : index
    %c0_130 = arith.constant 0 : index
    %107 = vector.load %arg12[%c2_129, %c0_130] : memref<16x32xf32, #tpu.memory_space<vmem>>, vector<12x32xf32>
    %c3_131 = arith.constant 3 : index
    %c0_132 = arith.constant 0 : index
    %108 = vector.load %arg12[%c3_131, %c0_132] : memref<16x32xf32, #tpu.memory_space<vmem>>, vector<12x32xf32>
    %c4_133 = arith.constant 4 : index
    %c0_134 = arith.constant 0 : index
    %109 = vector.load %arg12[%c4_133, %c0_134] : memref<16x32xf32, #tpu.memory_space<vmem>>, vector<12x32xf32>
    %110 = tpu.concatenate %105, %106, %107, %108, %109 in 1 : vector<12x32xf32>, vector<12x32xf32>, vector<12x32xf32>, vector<12x32xf32>, vector<12x32xf32> -> vector<12x160xf32>
    %c0_135 = arith.constant 0 : index
    %c0_136 = arith.constant 0 : index
    %111 = vector.load %arg4[%c0_135, %c0_136] : memref<160x32xf32, #tpu.memory_space<vmem>>, vector<160x32xf32>
    %cst_137 = arith.constant dense<0.000000e+00> : vector<12x32xf32>
    %112 = tpu.matmul %110, %111, %cst_137 {dimension_numbers = #tpu.dot_dimension_numbers<[1], [0], [0], [1], [0, 0, 1, 1], [], []>} : vector<12x160xf32>, vector<160x32xf32>, vector<12x32xf32> -> vector<12x32xf32>
    %c0_138 = arith.constant 0 : index
    %c0_139 = arith.constant 0 : index
    %113 = vector.load %arg5[%c0_138, %c0_139] : memref<1x32xf32, #tpu.memory_space<vmem>>, vector<1x32xf32>
    %114 = vector.broadcast %113 : vector<1x32xf32> to vector<12x32xf32>
    %115 = arith.addf %112, %114 : vector<12x32xf32>
    %cst_140 = arith.constant 0.000000e+00 : f32
    %116 = vector.broadcast %cst_140 : f32 to vector<12x32xf32>
    %117 = arith.maximumf %115, %116 : vector<12x32xf32>
    %cst_141 = arith.constant dense<0xFF800000> : vector<32xf32>
    %118 = vector.multi_reduction <maximumf>, %117, %cst_141 [0] : vector<12x32xf32> to vector<32xf32>
    %119 = vector.shape_cast %118 : vector<32xf32> to vector<1x32xf32>
    %cst_142 = arith.constant 0.000000e+00 : f32
    %120 = vector.broadcast %cst_142 : f32 to vector<1x32xf32>
    %c0_143 = arith.constant 0 : index
    %c0_144 = arith.constant 0 : index
    %121 = vector.load %arg12[%c0_143, %c0_144] : memref<16x32xf32, #tpu.memory_space<vmem>>, vector<1x32xf32>
    tpu.vector_store %arg12[%c0_143, %c0_144], %120 {strides = array<i32>} : memref<16x32xf32, #tpu.memory_space<vmem>>, vector<1x32xf32>,
    %c13_145 = arith.constant 13 : index
    %c0_146 = arith.constant 0 : index
    %122 = vector.load %arg12[%c13_145, %c0_146] : memref<16x32xf32, #tpu.memory_space<vmem>>, vector<1x32xf32>
    tpu.vector_store %arg12[%c13_145, %c0_146], %120 {strides = array<i32>} : memref<16x32xf32, #tpu.memory_space<vmem>>, vector<1x32xf32>,
    %c1_147 = arith.constant 1 : index
    %c0_148 = arith.constant 0 : index
    %123 = vector.load %arg12[%c1_147, %c0_148] : memref<16x32xf32, #tpu.memory_space<vmem>>, vector<12x32xf32>
    tpu.vector_store %arg12[%c1_147, %c0_148], %117 {strides = array<i32>} : memref<16x32xf32, #tpu.memory_space<vmem>>, vector<12x32xf32>,
    %c0_149 = arith.constant 0 : index
    %c0_150 = arith.constant 0 : index
    %124 = vector.load %arg12[%c0_149, %c0_150] : memref<16x32xf32, #tpu.memory_space<vmem>>, vector<10x32xf32>
    %c1_151 = arith.constant 1 : index
    %c0_152 = arith.constant 0 : index
    %125 = vector.load %arg12[%c1_151, %c0_152] : memref<16x32xf32, #tpu.memory_space<vmem>>, vector<10x32xf32>
    %c2_153 = arith.constant 2 : index
    %c0_154 = arith.constant 0 : index
    %126 = vector.load %arg12[%c2_153, %c0_154] : memref<16x32xf32, #tpu.memory_space<vmem>>, vector<10x32xf32>
    %c3_155 = arith.constant 3 : index
    %c0_156 = arith.constant 0 : index
    %127 = vector.load %arg12[%c3_155, %c0_156] : memref<16x32xf32, #tpu.memory_space<vmem>>, vector<10x32xf32>
    %c4_157 = arith.constant 4 : index
    %c0_158 = arith.constant 0 : index
    %128 = vector.load %arg12[%c4_157, %c0_158] : memref<16x32xf32, #tpu.memory_space<vmem>>, vector<10x32xf32>
    %129 = tpu.concatenate %124, %125, %126, %127, %128 in 1 : vector<10x32xf32>, vector<10x32xf32>, vector<10x32xf32>, vector<10x32xf32>, vector<10x32xf32> -> vector<10x160xf32>
    %c0_159 = arith.constant 0 : index
    %c0_160 = arith.constant 0 : index
    %130 = vector.load %arg6[%c0_159, %c0_160] : memref<160x32xf32, #tpu.memory_space<vmem>>, vector<160x32xf32>
    %cst_161 = arith.constant dense<0.000000e+00> : vector<10x32xf32>
    %131 = tpu.matmul %129, %130, %cst_161 {dimension_numbers = #tpu.dot_dimension_numbers<[1], [0], [0], [1], [0, 0, 1, 1], [], []>} : vector<10x160xf32>, vector<160x32xf32>, vector<10x32xf32> -> vector<10x32xf32>
    %c0_162 = arith.constant 0 : index
    %c0_163 = arith.constant 0 : index
    %132 = vector.load %arg7[%c0_162, %c0_163] : memref<1x32xf32, #tpu.memory_space<vmem>>, vector<1x32xf32>
    %133 = vector.broadcast %132 : vector<1x32xf32> to vector<10x32xf32>
    %134 = arith.addf %131, %133 : vector<10x32xf32>
    %cst_164 = arith.constant 0.000000e+00 : f32
    %135 = vector.broadcast %cst_164 : f32 to vector<10x32xf32>
    %136 = arith.maximumf %134, %135 : vector<10x32xf32>
    %cst_165 = arith.constant dense<0xFF800000> : vector<32xf32>
    %137 = vector.multi_reduction <maximumf>, %136, %cst_165 [0] : vector<10x32xf32> to vector<32xf32>
    %138 = vector.shape_cast %137 : vector<32xf32> to vector<1x32xf32>
    %cst_166 = arith.constant 0.000000e+00 : f32
    %139 = vector.broadcast %cst_166 : f32 to vector<1x32xf32>
    %c0_167 = arith.constant 0 : index
    %c0_168 = arith.constant 0 : index
    %140 = vector.load %arg12[%c0_167, %c0_168] : memref<16x32xf32, #tpu.memory_space<vmem>>, vector<1x32xf32>
    tpu.vector_store %arg12[%c0_167, %c0_168], %139 {strides = array<i32>} : memref<16x32xf32, #tpu.memory_space<vmem>>, vector<1x32xf32>,
    %c11_169 = arith.constant 11 : index
    %c0_170 = arith.constant 0 : index
    %141 = vector.load %arg12[%c11_169, %c0_170] : memref<16x32xf32, #tpu.memory_space<vmem>>, vector<1x32xf32>
    tpu.vector_store %arg12[%c11_169, %c0_170], %139 {strides = array<i32>} : memref<16x32xf32, #tpu.memory_space<vmem>>, vector<1x32xf32>,
    %c1_171 = arith.constant 1 : index
    %c0_172 = arith.constant 0 : index
    %142 = vector.load %arg12[%c1_171, %c0_172] : memref<16x32xf32, #tpu.memory_space<vmem>>, vector<10x32xf32>
    tpu.vector_store %arg12[%c1_171, %c0_172], %136 {strides = array<i32>} : memref<16x32xf32, #tpu.memory_space<vmem>>, vector<10x32xf32>,
    %c0_173 = arith.constant 0 : index
    %c0_174 = arith.constant 0 : index
    %143 = vector.load %arg12[%c0_173, %c0_174] : memref<16x32xf32, #tpu.memory_space<vmem>>, vector<8x32xf32>
    %c1_175 = arith.constant 1 : index
    %c0_176 = arith.constant 0 : index
    %144 = vector.load %arg12[%c1_175, %c0_176] : memref<16x32xf32, #tpu.memory_space<vmem>>, vector<8x32xf32>
    %c2_177 = arith.constant 2 : index
    %c0_178 = arith.constant 0 : index
    %145 = vector.load %arg12[%c2_177, %c0_178] : memref<16x32xf32, #tpu.memory_space<vmem>>, vector<8x32xf32>
    %c3_179 = arith.constant 3 : index
    %c0_180 = arith.constant 0 : index
    %146 = vector.load %arg12[%c3_179, %c0_180] : memref<16x32xf32, #tpu.memory_space<vmem>>, vector<8x32xf32>
    %c4_181 = arith.constant 4 : index
    %c0_182 = arith.constant 0 : index
    %147 = vector.load %arg12[%c4_181, %c0_182] : memref<16x32xf32, #tpu.memory_space<vmem>>, vector<8x32xf32>
    %148 = tpu.concatenate %143, %144, %145, %146, %147 in 1 : vector<8x32xf32>, vector<8x32xf32>, vector<8x32xf32>, vector<8x32xf32>, vector<8x32xf32> -> vector<8x160xf32>
    %c0_183 = arith.constant 0 : index
    %c0_184 = arith.constant 0 : index
    %149 = vector.load %arg8[%c0_183, %c0_184] : memref<160x32xf32, #tpu.memory_space<vmem>>, vector<160x32xf32>
    %cst_185 = arith.constant dense<0.000000e+00> : vector<8x32xf32>
    %150 = tpu.matmul %148, %149, %cst_185 {dimension_numbers = #tpu.dot_dimension_numbers<[1], [0], [0], [1], [0, 0, 1, 1], [], []>} : vector<8x160xf32>, vector<160x32xf32>, vector<8x32xf32> -> vector<8x32xf32>
    %c0_186 = arith.constant 0 : index
    %c0_187 = arith.constant 0 : index
    %151 = vector.load %arg9[%c0_186, %c0_187] : memref<1x32xf32, #tpu.memory_space<vmem>>, vector<1x32xf32>
    %152 = vector.broadcast %151 : vector<1x32xf32> to vector<8x32xf32>
    %153 = arith.addf %150, %152 : vector<8x32xf32>
    %cst_188 = arith.constant 0.000000e+00 : f32
    %154 = vector.broadcast %cst_188 : f32 to vector<8x32xf32>
    %155 = arith.maximumf %153, %154 : vector<8x32xf32>
    %cst_189 = arith.constant dense<0xFF800000> : vector<32xf32>
    %156 = vector.multi_reduction <maximumf>, %155, %cst_189 [0] : vector<8x32xf32> to vector<32xf32>
    %157 = vector.shape_cast %156 : vector<32xf32> to vector<1x32xf32>
    %158 = tpu.concatenate %100, %119, %138, %157 in 1 : vector<1x32xf32>, vector<1x32xf32>, vector<1x32xf32>, vector<1x32xf32> -> vector<1x128xf32>
    %c1_190 = arith.constant 1 : index
    %c0_191 = arith.constant 0 : index
    %159 = vector.load %arg10[%c1_190, %c0_191] : memref<2x128xf32, #tpu.memory_space<vmem>>, vector<1x128xf32>
    tpu.vector_store %arg10[%c1_190, %c0_191], %158 {strides = array<i32>} : memref<2x128xf32, #tpu.memory_space<vmem>>, vector<1x128xf32>,
    return
  }
  func.func @transform_0(%arg0: i32) -> (i32, i32, i32) {
    %c0_i32 = arith.constant 0 : i32
    %c0_i32_0 = arith.constant 0 : i32
    %c0_i32_1 = arith.constant 0 : i32
    return %arg0, %c0_i32, %c0_i32_0 : i32, i32, i32
  }
  func.func @transform_1(%arg0: i32) -> (i32, i32) {
    %c0_i32 = arith.constant 0 : i32
    %c0_i32_0 = arith.constant 0 : i32
    %c0_i32_1 = arith.constant 0 : i32
    return %c0_i32, %c0_i32_0 : i32, i32
  }
  func.func @transform_2(%arg0: i32) -> (i32, i32) {
    %c0_i32 = arith.constant 0 : i32
    %c0_i32_0 = arith.constant 0 : i32
    %c0_i32_1 = arith.constant 0 : i32
    return %c0_i32, %c0_i32_0 : i32, i32
  }
  func.func @transform_3(%arg0: i32) -> (i32, i32) {
    %c0_i32 = arith.constant 0 : i32
    %c0_i32_0 = arith.constant 0 : i32
    %c0_i32_1 = arith.constant 0 : i32
    return %c0_i32, %c0_i32_0 : i32, i32
  }
  func.func @transform_4(%arg0: i32) -> (i32, i32) {
    %c0_i32 = arith.constant 0 : i32
    %c0_i32_0 = arith.constant 0 : i32
    %c0_i32_1 = arith.constant 0 : i32
    return %c0_i32, %c0_i32_0 : i32, i32
  }
  func.func @transform_5(%arg0: i32) -> (i32, i32) {
    %c0_i32 = arith.constant 0 : i32
    %c0_i32_0 = arith.constant 0 : i32
    %c0_i32_1 = arith.constant 0 : i32
    return %c0_i32, %c0_i32_0 : i32, i32
  }
  func.func @transform_6(%arg0: i32) -> (i32, i32) {
    %c0_i32 = arith.constant 0 : i32
    %c0_i32_0 = arith.constant 0 : i32
    %c0_i32_1 = arith.constant 0 : i32
    return %c0_i32, %c0_i32_0 : i32, i32
  }
  func.func @transform_7(%arg0: i32) -> (i32, i32) {
    %c0_i32 = arith.constant 0 : i32
    %c0_i32_0 = arith.constant 0 : i32
    %c0_i32_1 = arith.constant 0 : i32
    return %c0_i32, %c0_i32_0 : i32, i32
  }
  func.func @transform_8(%arg0: i32) -> (i32, i32) {
    %c0_i32 = arith.constant 0 : i32
    %c0_i32_0 = arith.constant 0 : i32
    %c0_i32_1 = arith.constant 0 : i32
    return %c0_i32, %c0_i32_0 : i32, i32
  }
  func.func @transform_9(%arg0: i32) -> (i32, i32) {
    %c0_i32 = arith.constant 0 : i32
    %c0_i32_0 = arith.constant 0 : i32
    return %arg0, %c0_i32 : i32, i32
  }
}

</mosaic_0001>

<llo_original>
// kernel: convnet_encoder3.1
$region0: #{convnet_encoder3.1}
  #allocation0 [shape = 'u32[]', space=smem, size = 0x4, offset = 0x4, fixed_abs, tag = 'smem constant byte address 0x4 - core index']
  #allocation1 [shape = 'u32[144,128]{1,0:T(1,128)}', space=vmem, size = 0x12000, scoped, tag = 'internal scratch']
  #allocation2 [shape = 'f32[18,32]{1,0:T(8,128)}', space=vmem, size = 0x3000, scoped, tag = 'scratch operand']
  #allocation3 [shape = 'f32[16,32]{1,0:T(8,128)}', space=vmem, size = 0x2000, scoped, tag = 'scratch operand']
  %s0 = inlined_call_operand.vmem [shape: f32[2,16,32], index: 0, kind: input, shape index: {}]
  %s1 = inlined_call_operand.hbm [shape: f32[160,32], index: 1, kind: input, shape index: {}]
  %s2 = inlined_call_operand.vmem [shape: f32[1,32], index: 2, kind: input, shape index: {}]
  %s3 = inlined_call_operand.hbm [shape: f32[160,32], index: 3, kind: input, shape index: {}]
  %s4 = inlined_call_operand.vmem [shape: f32[1,32], index: 4, kind: input, shape index: {}]
  %s5 = inlined_call_operand.hbm [shape: f32[160,32], index: 5, kind: input, shape index: {}]
  %s6 = inlined_call_operand.vmem [shape: f32[1,32], index: 6, kind: input, shape index: {}]
  %s7 = inlined_call_operand.hbm [shape: f32[160,32], index: 7, kind: input, shape index: {}]
  %s8 = inlined_call_operand.vmem [shape: f32[1,32], index: 8, kind: input, shape index: {}]
  %s9 = inlined_call_operand.hbm [shape: f32[2,128], index: 9, kind: output, shape index: {}]
  %s10 = sld [smem:[#allocation0]]
  $region62: #{convnet_encoder3.1} parent=0
    _
  %s12 = ssub.s32 1, %s10
  %s13 = scalar_select 0, %s12, %s10
  $region1: #{convnet_encoder3.1} parent=0
    #allocation4 [shape = 'u8[81920]{0}', space=vmem, size = 0x14000, scoped, tag = 'input window, operand 1, single buffered']
    #allocation5 [shape = 's32[1]{0}', space=sflag, size = 0x4, scoped, tag = 'scoped memory for convnet_encoder3.1']
    #allocation6 [shape = 's32[1]{0}', space=sflag, size = 0x4, scoped, tag = 'scoped memory for convnet_encoder3.1']
    #allocation7 [shape = 'u8[81920]{0}', space=vmem, size = 0x14000, scoped, tag = 'input window, operand 3, single buffered']
    #allocation8 [shape = 's32[1]{0}', space=sflag, size = 0x4, scoped, tag = 'scoped memory for convnet_encoder3.1']
    #allocation9 [shape = 'u8[81920]{0}', space=vmem, size = 0x14000, scoped, tag = 'input window, operand 5, single buffered']
    #allocation10 [shape = 'u8[81920]{0}', space=vmem, size = 0x14000, scoped, tag = 'input window, operand 7, single buffered']
    #allocation11 [shape = 's32[1]{0}', space=sflag, size = 0x4, scoped, tag = 'scoped memory for convnet_encoder3.1']
    #allocation12 [shape = 'u8[1024]{0}', space=vmem, size = 0x400, scoped, tag = 'output window, operand 0, single buffered']
    %14 = vsyncpa [#allocation5], 0
    %15 = vsyncpa [#allocation8], 0
    %16 = vsyncpa [#allocation11], 0
    %17 = vsyncpa [#allocation6], 0
    // Predicated region
    $region2: #{convnet_encoder3.1} parent=1 // pred_check
      _
    $region3: #{convnet_encoder3.1} parent=1 // pred_check_branch
      %19 = sbr.rel (0) target = $region5
    $region4: #{convnet_encoder3.1} parent=1 // pred_region
      _
    $region5: #{convnet_encoder3.1} parent=1 // pred_fallthru
      _
    // Predicated region
    $region6: #{convnet_encoder3.1} parent=1 // pred_check
      _
    $region7: #{convnet_encoder3.1} parent=1 // pred_check_branch
      %21 = sbr.rel (0) target = $region9
    $region8: #{convnet_encoder3.1} parent=1 // pred_region
      %s23 = ssub.s32 2560, 2560
      %24 = vsyncadd [#allocation5], %s23
      %s25 = sshll.u32 [#allocation4], 4
      %s26 = int_to_ptr.vmem [resolvable:$true] %s25
      %31 = dma.hbm_to_vmem [thread:$0]  %s1, 2560, %s26, [#allocation5], 128, 128, 8
    $region9: #{convnet_encoder3.1} parent=1 // pred_fallthru
      _
    // Predicated region
    $region10: #{convnet_encoder3.1} parent=1 // pred_check
      _
    $region11: #{convnet_encoder3.1} parent=1 // pred_check_branch
      %33 = sbr.rel (0) target = $region13
    $region12: #{convnet_encoder3.1} parent=1 // pred_region
      _
    $region13: #{convnet_encoder3.1} parent=1 // pred_fallthru
      _
    // Predicated region
    $region14: #{convnet_encoder3.1} parent=1 // pred_check
      _
    $region15: #{convnet_encoder3.1} parent=1 // pred_check_branch
      %35 = sbr.rel (0) target = $region17
    $region16: #{convnet_encoder3.1} parent=1 // pred_region
      %s37 = ssub.s32 2560, 2560
      %38 = vsyncadd [#allocation8], %s37
      %s39 = sshll.u32 [#allocation7], 4
      %s40 = int_to_ptr.vmem [resolvable:$true] %s39
      %45 = dma.hbm_to_vmem [thread:$0]  %s3, 2560, %s40, [#allocation8], 128, 128, 8
    $region17: #{convnet_encoder3.1} parent=1 // pred_fallthru
      _
    // Predicated region
    $region18: #{convnet_encoder3.1} parent=1 // pred_check
      _
    $region19: #{convnet_encoder3.1} parent=1 // pred_check_branch
      %47 = sbr.rel (0) target = $region21
    $region20: #{convnet_encoder3.1} parent=1 // pred_region
      _
    $region21: #{convnet_encoder3.1} parent=1 // pred_fallthru
      _
    // Predicated region
    $region22: #{convnet_encoder3.1} parent=1 // pred_check
      _
    $region23: #{convnet_encoder3.1} parent=1 // pred_check_branch
      %49 = sbr.rel (0) target = $region25
    $region24: #{convnet_encoder3.1} parent=1 // pred_region
      %s51 = ssub.s32 2560, 2560
      %52 = vsyncadd [#allocation8], %s51
      %s53 = sshll.u32 [#allocation9], 4
      %s54 = int_to_ptr.vmem [resolvable:$true] %s53
      %59 = dma.hbm_to_vmem [thread:$0]  %s5, 2560, %s54, [#allocation8], 128, 128, 8
    $region25: #{convnet_encoder3.1} parent=1 // pred_fallthru
      _
    // Predicated region
    $region26: #{convnet_encoder3.1} parent=1 // pred_check
      _
    $region27: #{convnet_encoder3.1} parent=1 // pred_check_branch
      %61 = sbr.rel (0) target = $region29
    $region28: #{convnet_encoder3.1} parent=1 // pred_region
      _
    $region29: #{convnet_encoder3.1} parent=1 // pred_fallthru
      _
    // Predicated region
    $region30: #{convnet_encoder3.1} parent=1 // pred_check
      _
    $region31: #{convnet_encoder3.1} parent=1 // pred_check_branch
      %63 = sbr.rel (0) target = $region33
    $region32: #{convnet_encoder3.1} parent=1 // pred_region
      %s65 = ssub.s32 2560, 2560
      %66 = vsyncadd [#allocation11], %s65
      %s67 = sshll.u32 [#allocation10], 4
      %s68 = int_to_ptr.vmem [resolvable:$true] %s67
      %73 = dma.hbm_to_vmem [thread:$0]  %s7, 2560, %s68, [#allocation11], 128, 128, 8
    $region33: #{convnet_encoder3.1} parent=1 // pred_fallthru
      _
    // Predicated region
    $region34: #{convnet_encoder3.1} parent=1 // pred_check
      _
    $region35: #{convnet_encoder3.1} parent=1 // pred_check_branch
      %75 = sbr.rel (0) target = $region37
    $region36: #{convnet_encoder3.1} parent=1 // pred_region
      _
    $region37: #{convnet_encoder3.1} parent=1 // pred_fallthru
      _
    // Predicated region
    $region38: #{convnet_encoder3.1} parent=1 // pred_check
      _
    $region39: #{convnet_encoder3.1} parent=1 // pred_check_branch
      %77 = sbr.rel (0) target = $region41
    $region40: #{convnet_encoder3.1} parent=1 // pred_region
      %78 = dma.done [#allocation5], 2560
    $region41: #{convnet_encoder3.1} parent=1 // pred_fallthru
      _
    // Predicated region
    $region42: #{convnet_encoder3.1} parent=1 // pred_check
      _
    $region43: #{convnet_encoder3.1} parent=1 // pred_check_branch
      %80 = sbr.rel (0) target = $region45
    $region44: #{convnet_encoder3.1} parent=1 // pred_region
      %81 = dma.done [#allocation8], 2560
    $region45: #{convnet_encoder3.1} parent=1 // pred_fallthru
      _
    // Predicated region
    $region46: #{convnet_encoder3.1} parent=1 // pred_check
      _
    $region47: #{convnet_encoder3.1} parent=1 // pred_check_branch
      %83 = sbr.rel (0) target = $region49
    $region48: #{convnet_encoder3.1} parent=1 // pred_region
      %84 = dma.done [#allocation8], 2560
    $region49: #{convnet_encoder3.1} parent=1 // pred_fallthru
      _
    // Predicated region
    $region50: #{convnet_encoder3.1} parent=1 // pred_check
      _
    $region51: #{convnet_encoder3.1} parent=1 // pred_check_branch
      %86 = sbr.rel (0) target = $region53
    $region52: #{convnet_encoder3.1} parent=1 // pred_region
      %87 = dma.done [#allocation11], 2560
    $region53: #{convnet_encoder3.1} parent=1 // pred_fallthru
      _
    %v88 = vld [vmem:[%s0] sm:$0xff]
    %v89 = vld [vmem:[%s0 + $0x8] sm:$0xff]
    %vm90 = vcmask 253952
    %91 = vst.msk [vmem:[#allocation2] sm:$0x1] %vm90, 0.0
    %92 = vst.msk [vmem:[#allocation2 + $0x11] sm:$0x1] %vm90, 0.0
    %vm93 = vcmask 261120
    %94 = vst.msk [vmem:[#allocation2 + $0x1] sm:$0xff] %vm93, %v88
    %95 = vst.msk [vmem:[#allocation2 + $0x9] sm:$0xff] %vm93, %v89
    %v96 = vld [vmem:[#allocation2] sm:$0xff]
    %v97 = vld [vmem:[#allocation2 + $0x8] sm:$0x3f]
    %v98 = vld [vmem:[#allocation2 + $0x1] sm:$0xff]
    %v99 = vld [vmem:[#allocation2 + $0x9] sm:$0x3f]
    %v100 = vld [vmem:[#allocation2 + $0x2] sm:$0xff]
    %v101 = vld [vmem:[#allocation2 + $0xa] sm:$0x3f]
    %v102 = vld [vmem:[#allocation2 + $0x3] sm:$0xff]
    %v103 = vld [vmem:[#allocation2 + $0xb] sm:$0x3f]
    %v104 = vld [vmem:[#allocation2 + $0x4] sm:$0xff]
    %v105 = vld [vmem:[#allocation2 + $0xc] sm:$0x3f]
    %108 = vrot.lane.b32.xlu0 %v98, 32
    %v109 = vpop.permute.xlu0 %108
    %110 = vrot.lane.b32.xlu0 %v99, 32
    %v111 = vpop.permute.xlu0 %110
    %116 = vrot.lane.b32.xlu0 %v100, 64
    %v117 = vpop.permute.xlu0 %116
    %118 = vrot.lane.b32.xlu0 %v101, 64
    %v119 = vpop.permute.xlu0 %118
    %124 = vrot.lane.b32.xlu0 %v102, 96
    %v125 = vpop.permute.xlu0 %124
    %126 = vrot.lane.b32.xlu0 %v103, 96
    %v127 = vpop.permute.xlu0 %126
    %v130 = vsel %vm93, %v96, %v109
    %v131 = vsel %vm93, %v97, %v111
    %vm132 = vcmask 523264
    %v133 = vsel %vm132, %v130, %v117
    %v134 = vsel %vm132, %v131, %v119
    %vm135 = vcmask 785408
    %v136 = vsel %vm135, %v133, %v125
    %v137 = vsel %vm135, %v134, %v127
    %v138 = vld [vmem:[#allocation4] sm:$0xff]
    %v139 = vld [vmem:[#allocation4 + $0x8] sm:$0xff]
    %v140 = vld [vmem:[#allocation4 + $0x10] sm:$0xff]
    %v141 = vld [vmem:[#allocation4 + $0x18] sm:$0xff]
    %v142 = vld [vmem:[#allocation4 + $0x20] sm:$0xff]
    %v143 = vld [vmem:[#allocation4 + $0x28] sm:$0xff]
    %v144 = vld [vmem:[#allocation4 + $0x30] sm:$0xff]
    %v145 = vld [vmem:[#allocation4 + $0x38] sm:$0xff]
    %v146 = vld [vmem:[#allocation4 + $0x40] sm:$0xff]
    %v147 = vld [vmem:[#allocation4 + $0x48] sm:$0xff]
    %v148 = vld [vmem:[#allocation4 + $0x50] sm:$0xff]
    %v149 = vld [vmem:[#allocation4 + $0x58] sm:$0xff]
    %v150 = vld [vmem:[#allocation4 + $0x60] sm:$0xff]
    %v151 = vld [vmem:[#allocation4 + $0x68] sm:$0xff]
    %v152 = vld [vmem:[#allocation4 + $0x70] sm:$0xff]
    %v153 = vld [vmem:[#allocation4 + $0x78] sm:$0xff]
    %v154 = vld [vmem:[#allocation4 + $0x80] sm:$0xff]
    %v155 = vld [vmem:[#allocation4 + $0x88] sm:$0xff]
    %v156 = vld [vmem:[#allocation4 + $0x90] sm:$0xff]
    %v157 = vld [vmem:[#allocation4 + $0x98] sm:$0xff]
    %v158 = vld [vmem:[%s2] sm:$0x1]
    %v160 = vlaneseq
    %v161 = vshrl.u32 %v160, 7
    %v162 = vsub.s32 0, %v161
    %v163 = vrot.slane %v158, %v162
    %v166 = vsel %vm93, %v104, 0
    %v169 = vsel %vm93, %v105, 0
    %171 = vmatprep.subr.mxu0 0.0
    %172 = vmatpush1.msra.mxu0 %v138
    %173 = vmatprep.subr.mxu0 0.0
    %174 = vmatpush1.msra.mxu0 %v139
    %175 = vmatprep.subr.mxu0 0.0
    %176 = vmatpush1.msra.mxu0 %v140
    %177 = vmatprep.subr.mxu0 0.0
    %178 = vmatpush1.msra.mxu0 %v141
    %179 = vmatprep.subr.mxu0 0.0
    %180 = vmatpush1.msra.mxu0 %v142
    %181 = vmatprep.subr.mxu0 0.0
    %182 = vmatpush1.msra.mxu0 %v143
    %183 = vmatprep.subr.mxu0 0.0
    %184 = vmatpush1.msra.mxu0 %v144
    %185 = vmatprep.subr.mxu0 0.0
    %186 = vmatpush1.msra.mxu0 %v145
    %187 = vmatprep.subr.mxu0 0.0
    %188 = vmatpush1.msra.mxu0 %v146
    %189 = vmatprep.subr.mxu0 0.0
    %190 = vmatpush1.msra.mxu0 %v147
    %191 = vmatprep.subr.mxu0 0.0
    %192 = vmatpush1.msra.mxu0 %v148
    %193 = vmatprep.subr.mxu0 0.0
    %194 = vmatpush1.msra.mxu0 %v149
    %195 = vmatprep.subr.mxu0 0.0
    %196 = vmatpush1.msra.mxu0 %v150
    %197 = vmatprep.subr.mxu0 0.0
    %198 = vmatpush1.msra.mxu0 %v151
    %199 = vmatprep.subr.mxu0 0.0
    %200 = vmatpush1.msra.mxu0 %v152
    %201 = vmatprep.subr.mxu0 0.0
    %202 = vmatpush1.msra.mxu0 %v153
    %203 = vmatprep.subr.mxu0 0.0
    %204 = vmatpush1.msra.mxu0 %v154
    %205 = vmatprep.subr.mxu0 0.0
    %206 = vmatpush1.msra.mxu0 %v155
    %207 = vmatprep.subr.mxu0 0.0
    %208 = vmatpush1.msra.mxu0 %v156
    %209 = vmatprep.subr.mxu0 0.0
    %210 = vmatpush1.msra.mxu0 %v157
    %211 = vmatprep.subr.mxu0 0.0
    %212 = vmatpush1.msra.mxu0 0.0
    %213 = vmatprep.subr.mxu0 0.0
    %214 = vmatpush1.msra.mxu0 0.0
    %215 = vmatprep.subr.mxu0 0.0
    %216 = vmatpush1.msra.mxu0 0.0
    %217 = vmatprep.subr.mxu0 0.0
    %218 = vmatpush1.msra.mxu0 0.0
    %219 = vmatprep.subr.mxu0 0.0
    %220 = vmatpush1.msra.mxu0 0.0
    %221 = vmatprep.subr.mxu0 0.0
    %222 = vmatpush1.msra.mxu0 0.0
    %223 = vmatprep.subr.mxu0 0.0
    %224 = vmatpush1.msra.mxu0 0.0
    %225 = vmatprep.subr.mxu0 0.0
    %226 = vmatpush1.msra.mxu0 0.0
    %227 = vmatprep.subr.mxu0 0.0
    %228 = vmatpush1.msra.mxu0 0.0
    %229 = vmatprep.subr.mxu0 0.0
    %230 = vmatpush1.msra.mxu0 0.0
    %231 = vmatprep.subr.mxu0 0.0
    %232 = vmatpush1.msra.mxu0 0.0
    %233 = vmatprep.subr.mxu0 0.0
    %234 = vmatpush1.msra.mxu0 0.0
    %235 = vmatprep.mubr.f32.mxu0 %v166
    %236 = vmatmul.mubr.f32.gmra.mrb[0].mxu0 %v136
    %v237 = vpop.f32.mrb[0].mxu0
    %v238 = vadd.f32 %v163, %v237
    %v239 = vpop.f32.mrb[0].mxu0
    %240 = vmatprep.mubr.f32.mxu0 %v169
    %241 = vmatmul.mubr.f32.gmra.mrb[0].mxu0 %v137
    %v242 = vpop.f32.mrb[0].mxu0
    %v243 = vadd.f32 %v163, %v242
    %v244 = vpop.f32.mrb[0].mxu0
    %245 = vdwg.mxu0
    %v246 = vmax.f32 %v238, 0.0
    %v247 = vmax.f32 %v243, 0.0
    %v248 = vsel %vm93, %v246, -inf
    %vm249 = vcmask 259072
    %v250 = vsel %vm249, %v247, -inf
    %v251 = vmax.f32 %v248, %v250
    %v252 = vrot.slane %v251, 4
    %v253 = vmax.f32 %v251, %v252
    %v254 = vrot.slane %v253, 2
    %v255 = vmax.f32 %v253, %v254
    %v256 = vrot.slane %v255, 1
    %v257 = vmax.f32 %v255, %v256
    %258 = vst.msk [vmem:[#allocation3] sm:$0x1] %vm90, 0.0
    %259 = vst.msk [vmem:[#allocation3 + $0xf] sm:$0x1] %vm90, 0.0
    %260 = vst.msk [vmem:[#allocation3 + $0x1] sm:$0xff] %vm93, %v246
    %261 = vst.msk [vmem:[#allocation3 + $0x9] sm:$0x3f] %vm249, %v247
    %v262 = vld [vmem:[#allocation3] sm:$0xff]
    %v263 = vld [vmem:[#allocation3 + $0x8] sm:$0xf]
    %v264 = vld [vmem:[#allocation3 + $0x1] sm:$0xff]
    %v265 = vld [vmem:[#allocation3 + $0x9] sm:$0xf]
    %v266 = vld [vmem:[#allocation3 + $0x2] sm:$0xff]
    %v267 = vld [vmem:[#allocation3 + $0xa] sm:$0xf]
    %v268 = vld [vmem:[#allocation3 + $0x3] sm:$0xff]
    %v269 = vld [vmem:[#allocation3 + $0xb] sm:$0xf]
    %v270 = vld [vmem:[#allocation3 + $0x4] sm:$0xff]
    %v271 = vld [vmem:[#allocation3 + $0xc] sm:$0xf]
    %274 = vrot.lane.b32.xlu0 %v264, 32
    %v275 = vpop.permute.xlu0 %274
    %276 = vrot.lane.b32.xlu0 %v265, 32
    %v277 = vpop.permute.xlu0 %276
    %282 = vrot.lane.b32.xlu0 %v266, 64
    %v283 = vpop.permute.xlu0 %282
    %284 = vrot.lane.b32.xlu0 %v267, 64
    %v285 = vpop.permute.xlu0 %284
    %290 = vrot.lane.b32.xlu0 %v268, 96
    %v291 = vpop.permute.xlu0 %290
    %292 = vrot.lane.b32.xlu0 %v269, 96
    %v293 = vpop.permute.xlu0 %292
    %v296 = vsel %vm93, %v262, %v275
    %v297 = vsel %vm93, %v263, %v277
    %v298 = vsel %vm132, %v296, %v283
    %v299 = vsel %vm132, %v297, %v285
    %v300 = vsel %vm135, %v298, %v291
    %v301 = vsel %vm135, %v299, %v293
    %v302 = vld [vmem:[#allocation7] sm:$0xff]
    %v303 = vld [vmem:[#allocation7 + $0x8] sm:$0xff]
    %v304 = vld [vmem:[#allocation7 + $0x10] sm:$0xff]
    %v305 = vld [vmem:[#allocation7 + $0x18] sm:$0xff]
    %v306 = vld [vmem:[#allocation7 + $0x20] sm:$0xff]
    %v307 = vld [vmem:[#allocation7 + $0x28] sm:$0xff]
    %v308 = vld [vmem:[#allocation7 + $0x30] sm:$0xff]
    %v309 = vld [vmem:[#allocation7 + $0x38] sm:$0xff]
    %v310 = vld [vmem:[#allocation7 + $0x40] sm:$0xff]
    %v311 = vld [vmem:[#allocation7 + $0x48] sm:$0xff]
    %v312 = vld [vmem:[#allocation7 + $0x50] sm:$0xff]
    %v313 = vld [vmem:[#allocation7 + $0x58] sm:$0xff]
    %v314 = vld [vmem:[#allocation7 + $0x60] sm:$0xff]
    %v315 = vld [vmem:[#allocation7 + $0x68] sm:$0xff]
    %v316 = vld [vmem:[#allocation7 + $0x70] sm:$0xff]
    %v317 = vld [vmem:[#allocation7 + $0x78] sm:$0xff]
    %v318 = vld [vmem:[#allocation7 + $0x80] sm:$0xff]
    %v319 = vld [vmem:[#allocation7 + $0x88] sm:$0xff]
    %v320 = vld [vmem:[#allocation7 + $0x90] sm:$0xff]
    %v321 = vld [vmem:[#allocation7 + $0x98] sm:$0xff]
    %v322 = vld [vmem:[%s4] sm:$0x1]
    %v324 = vlaneseq
    %v325 = vshrl.u32 %v324, 7
    %v326 = vsub.s32 0, %v325
    %v327 = vrot.slane %v322, %v326
    %v330 = vsel %vm93, %v270, 0
    %v333 = vsel %vm93, %v271, 0
    %335 = vmatprep.subr.mxu0 0.0
    %336 = vmatpush1.msra.mxu0 %v302
    %337 = vmatprep.subr.mxu0 0.0
    %338 = vmatpush1.msra.mxu0 %v303
    %339 = vmatprep.subr.mxu0 0.0
    %340 = vmatpush1.msra.mxu0 %v304
    %341 = vmatprep.subr.mxu0 0.0
    %342 = vmatpush1.msra.mxu0 %v305
    %343 = vmatprep.subr.mxu0 0.0
    %344 = vmatpush1.msra.mxu0 %v306
    %345 = vmatprep.subr.mxu0 0.0
    %346 = vmatpush1.msra.mxu0 %v307
    %347 = vmatprep.subr.mxu0 0.0
    %348 = vmatpush1.msra.mxu0 %v308
    %349 = vmatprep.subr.mxu0 0.0
    %350 = vmatpush1.msra.mxu0 %v309
    %351 = vmatprep.subr.mxu0 0.0
    %352 = vmatpush1.msra.mxu0 %v310
    %353 = vmatprep.subr.mxu0 0.0
    %354 = vmatpush1.msra.mxu0 %v311
    %355 = vmatprep.subr.mxu0 0.0
    %356 = vmatpush1.msra.mxu0 %v312
    %357 = vmatprep.subr.mxu0 0.0
    %358 = vmatpush1.msra.mxu0 %v313
    %359 = vmatprep.subr.mxu0 0.0
    %360 = vmatpush1.msra.mxu0 %v314
    %361 = vmatprep.subr.mxu0 0.0
    %362 = vmatpush1.msra.mxu0 %v315
    %363 = vmatprep.subr.mxu0 0.0
    %364 = vmatpush1.msra.mxu0 %v316
    %365 = vmatprep.subr.mxu0 0.0
    %366 = vmatpush1.msra.mxu0 %v317
    %367 = vmatprep.subr.mxu0 0.0
    %368 = vmatpush1.msra.mxu0 %v318
    %369 = vmatprep.subr.mxu0 0.0
    %370 = vmatpush1.msra.mxu0 %v319
    %371 = vmatprep.subr.mxu0 0.0
    %372 = vmatpush1.msra.mxu0 %v320
    %373 = vmatprep.subr.mxu0 0.0
    %374 = vmatpush1.msra.mxu0 %v321
    %375 = vmatprep.subr.mxu0 0.0
    %376 = vmatpush1.msra.mxu0 0.0
    %377 = vmatprep.subr.mxu0 0.0
    %378 = vmatpush1.msra.mxu0 0.0
    %379 = vmatprep.subr.mxu0 0.0
    %380 = vmatpush1.msra.mxu0 0.0
    %381 = vmatprep.subr.mxu0 0.0
    %382 = vmatpush1.msra.mxu0 0.0
    %383 = vmatprep.subr.mxu0 0.0
    %384 = vmatpush1.msra.mxu0 0.0
    %385 = vmatprep.subr.mxu0 0.0
    %386 = vmatpush1.msra.mxu0 0.0
    %387 = vmatprep.subr.mxu0 0.0
    %388 = vmatpush1.msra.mxu0 0.0
    %389 = vmatprep.subr.mxu0 0.0
    %390 = vmatpush1.msra.mxu0 0.0
    %391 = vmatprep.subr.mxu0 0.0
    %392 = vmatpush1.msra.mxu0 0.0
    %393 = vmatprep.subr.mxu0 0.0
    %394 = vmatpush1.msra.mxu0 0.0
    %395 = vmatprep.subr.mxu0 0.0
    %396 = vmatpush1.msra.mxu0 0.0
    %397 = vmatprep.subr.mxu0 0.0
    %398 = vmatpush1.msra.mxu0 0.0
    %399 = vmatprep.mubr.f32.mxu0 %v330
    %400 = vmatmul.mubr.f32.gmra.mrb[0].mxu0 %v300
    %v401 = vpop.f32.mrb[0].mxu0
    %v402 = vadd.f32 %v327, %v401
    %v403 = vpop.f32.mrb[0].mxu0
    %404 = vmatprep.mubr.f32.mxu0 %v333
    %405 = vmatmul.mubr.f32.gmra.mrb[0].mxu0 %v301
    %v406 = vpop.f32.mrb[0].mxu0
    %v407 = vadd.f32 %v327, %v406
    %v408 = vpop.f32.mrb[0].mxu0
    %409 = vdwg.mxu0
    %v410 = vmax.f32 %v402, 0.0
    %v411 = vmax.f32 %v407, 0.0
    %v412 = vsel %vm93, %v410, -inf
    %vm413 = vcmask 257024
    %v414 = vsel %vm413, %v411, -inf
    %v415 = vmax.f32 %v412, %v414
    %v416 = vrot.slane %v415, 4
    %v417 = vmax.f32 %v415, %v416
    %v418 = vrot.slane %v417, 2
    %v419 = vmax.f32 %v417, %v418
    %v420 = vrot.slane %v419, 1
    %v421 = vmax.f32 %v419, %v420
    %422 = vst.msk [vmem:[#allocation3] sm:$0x1] %vm90, 0.0
    %423 = vst.msk [vmem:[#allocation3 + $0xd] sm:$0x1] %vm90, 0.0
    %424 = vst.msk [vmem:[#allocation3 + $0x1] sm:$0xff] %vm93, %v410
    %425 = vst.msk [vmem:[#allocation3 + $0x9] sm:$0xf] %vm413, %v411
    %v426 = vld [vmem:[#allocation3] sm:$0xff]
    %v427 = vld [vmem:[#allocation3 + $0x8] sm:$0x3]
    %v428 = vld [vmem:[#allocation3 + $0x1] sm:$0xff]
    %v429 = vld [vmem:[#allocation3 + $0x9] sm:$0x3]
    %v430 = vld [vmem:[#allocation3 + $0x2] sm:$0xff]
    %v431 = vld [vmem:[#allocation3 + $0xa] sm:$0x3]
    %v432 = vld [vmem:[#allocation3 + $0x3] sm:$0xff]
    %v433 = vld [vmem:[#allocation3 + $0xb] sm:$0x3]
    %v434 = vld [vmem:[#allocation3 + $0x4] sm:$0xff]
    %v435 = vld [vmem:[#allocation3 + $0xc] sm:$0x3]
    %438 = vrot.lane.b32.xlu0 %v428, 32
    %v439 = vpop.permute.xlu0 %438
    %440 = vrot.lane.b32.xlu0 %v429, 32
    %v441 = vpop.permute.xlu0 %440
    %446 = vrot.lane.b32.xlu0 %v430, 64
    %v447 = vpop.permute.xlu0 %446
    %448 = vrot.lane.b32.xlu0 %v431, 64
    %v449 = vpop.permute.xlu0 %448
    %454 = vrot.lane.b32.xlu0 %v432, 96
    %v455 = vpop.permute.xlu0 %454
    %456 = vrot.lane.b32.xlu0 %v433, 96
    %v457 = vpop.permute.xlu0 %456
    %v460 = vsel %vm93, %v426, %v439
    %v461 = vsel %vm93, %v427, %v441
    %v462 = vsel %vm132, %v460, %v447
    %v463 = vsel %vm132, %v461, %v449
    %v464 = vsel %vm135, %v462, %v455
    %v465 = vsel %vm135, %v463, %v457
    %v466 = vld [vmem:[#allocation9] sm:$0xff]
    %v467 = vld [vmem:[#allocation9 + $0x8] sm:$0xff]
    %v468 = vld [vmem:[#allocation9 + $0x10] sm:$0xff]
    %v469 = vld [vmem:[#allocation9 + $0x18] sm:$0xff]
    %v470 = vld [vmem:[#allocation9 + $0x20] sm:$0xff]
    %v471 = vld [vmem:[#allocation9 + $0x28] sm:$0xff]
    %v472 = vld [vmem:[#allocation9 + $0x30] sm:$0xff]
    %v473 = vld [vmem:[#allocation9 + $0x38] sm:$0xff]
    %v474 = vld [vmem:[#allocation9 + $0x40] sm:$0xff]
    %v475 = vld [vmem:[#allocation9 + $0x48] sm:$0xff]
    %v476 = vld [vmem:[#allocation9 + $0x50] sm:$0xff]
    %v477 = vld [vmem:[#allocation9 + $0x58] sm:$0xff]
    %v478 = vld [vmem:[#allocation9 + $0x60] sm:$0xff]
    %v479 = vld [vmem:[#allocation9 + $0x68] sm:$0xff]
    %v480 = vld [vmem:[#allocation9 + $0x70] sm:$0xff]
    %v481 = vld [vmem:[#allocation9 + $0x78] sm:$0xff]
    %v482 = vld [vmem:[#allocation9 + $0x80] sm:$0xff]
    %v483 = vld [vmem:[#allocation9 + $0x88] sm:$0xff]
    %v484 = vld [vmem:[#allocation9 + $0x90] sm:$0xff]
    %v485 = vld [vmem:[#allocation9 + $0x98] sm:$0xff]
    %v486 = vld [vmem:[%s6] sm:$0x1]
    %v488 = vlaneseq
    %v489 = vshrl.u32 %v488, 7
    %v490 = vsub.s32 0, %v489
    %v491 = vrot.slane %v486, %v490
    %v494 = vsel %vm93, %v434, 0
    %v497 = vsel %vm93, %v435, 0
    %499 = vmatprep.subr.mxu0 0.0
    %500 = vmatpush1.msra.mxu0 %v466
    %501 = vmatprep.subr.mxu0 0.0
    %502 = vmatpush1.msra.mxu0 %v467
    %503 = vmatprep.subr.mxu0 0.0
    %504 = vmatpush1.msra.mxu0 %v468
    %505 = vmatprep.subr.mxu0 0.0
    %506 = vmatpush1.msra.mxu0 %v469
    %507 = vmatprep.subr.mxu0 0.0
    %508 = vmatpush1.msra.mxu0 %v470
    %509 = vmatprep.subr.mxu0 0.0
    %510 = vmatpush1.msra.mxu0 %v471
    %511 = vmatprep.subr.mxu0 0.0
    %512 = vmatpush1.msra.mxu0 %v472
    %513 = vmatprep.subr.mxu0 0.0
    %514 = vmatpush1.msra.mxu0 %v473
    %515 = vmatprep.subr.mxu0 0.0
    %516 = vmatpush1.msra.mxu0 %v474
    %517 = vmatprep.subr.mxu0 0.0
    %518 = vmatpush1.msra.mxu0 %v475
    %519 = vmatprep.subr.mxu0 0.0
    %520 = vmatpush1.msra.mxu0 %v476
    %521 = vmatprep.subr.mxu0 0.0
    %522 = vmatpush1.msra.mxu0 %v477
    %523 = vmatprep.subr.mxu0 0.0
    %524 = vmatpush1.msra.mxu0 %v478
    %525 = vmatprep.subr.mxu0 0.0
    %526 = vmatpush1.msra.mxu0 %v479
    %527 = vmatprep.subr.mxu0 0.0
    %528 = vmatpush1.msra.mxu0 %v480
    %529 = vmatprep.subr.mxu0 0.0
    %530 = vmatpush1.msra.mxu0 %v481
    %531 = vmatprep.subr.mxu0 0.0
    %532 = vmatpush1.msra.mxu0 %v482
    %533 = vmatprep.subr.mxu0 0.0
    %534 = vmatpush1.msra.mxu0 %v483
    %535 = vmatprep.subr.mxu0 0.0
    %536 = vmatpush1.msra.mxu0 %v484
    %537 = vmatprep.subr.mxu0 0.0
    %538 = vmatpush1.msra.mxu0 %v485
    %539 = vmatprep.subr.mxu0 0.0
    %540 = vmatpush1.msra.mxu0 0.0
    %541 = vmatprep.subr.mxu0 0.0
    %542 = vmatpush1.msra.mxu0 0.0
    %543 = vmatprep.subr.mxu0 0.0
    %544 = vmatpush1.msra.mxu0 0.0
    %545 = vmatprep.subr.mxu0 0.0
    %546 = vmatpush1.msra.mxu0 0.0
    %547 = vmatprep.subr.mxu0 0.0
    %548 = vmatpush1.msra.mxu0 0.0
    %549 = vmatprep.subr.mxu0 0.0
    %550 = vmatpush1.msra.mxu0 0.0
    %551 = vmatprep.subr.mxu0 0.0
    %552 = vmatpush1.msra.mxu0 0.0
    %553 = vmatprep.subr.mxu0 0.0
    %554 = vmatpush1.msra.mxu0 0.0
    %555 = vmatprep.subr.mxu0 0.0
    %556 = vmatpush1.msra.mxu0 0.0
    %557 = vmatprep.subr.mxu0 0.0
    %558 = vmatpush1.msra.mxu0 0.0
    %559 = vmatprep.subr.mxu0 0.0
    %560 = vmatpush1.msra.mxu0 0.0
    %561 = vmatprep.subr.mxu0 0.0
    %562 = vmatpush1.msra.mxu0 0.0
    %563 = vmatprep.mubr.f32.mxu0 %v494
    %564 = vmatmul.mubr.f32.gmra.mrb[0].mxu0 %v464
    %v565 = vpop.f32.mrb[0].mxu0
    %v566 = vadd.f32 %v491, %v565
    %v567 = vpop.f32.mrb[0].mxu0
    %568 = vmatprep.mubr.f32.mxu0 %v497
    %569 = vmatmul.mubr.f32.gmra.mrb[0].mxu0 %v465
    %v570 = vpop.f32.mrb[0].mxu0
    %v571 = vadd.f32 %v491, %v570
    %v572 = vpop.f32.mrb[0].mxu0
    %573 = vdwg.mxu0
    %v574 = vmax.f32 %v566, 0.0
    %v575 = vmax.f32 %v571, 0.0
    %v576 = vsel %vm93, %v574, -inf
    %vm577 = vcmask 254976
    %v578 = vsel %vm577, %v575, -inf
    %v579 = vmax.f32 %v576, %v578
    %v580 = vrot.slane %v579, 4
    %v581 = vmax.f32 %v579, %v580
    %v582 = vrot.slane %v581, 2
    %v583 = vmax.f32 %v581, %v582
    %v584 = vrot.slane %v583, 1
    %v585 = vmax.f32 %v583, %v584
    %586 = vst.msk [vmem:[#allocation3] sm:$0x1] %vm90, 0.0
    %587 = vst.msk [vmem:[#allocation3 + $0xb] sm:$0x1] %vm90, 0.0
    %588 = vst.msk [vmem:[#allocation3 + $0x1] sm:$0xff] %vm93, %v574
    %589 = vst.msk [vmem:[#allocation3 + $0x9] sm:$0x3] %vm577, %v575
    %v590 = vld [vmem:[#allocation3] sm:$0xff]
    %v591 = vld [vmem:[#allocation3 + $0x1] sm:$0xff]
    %v592 = vld [vmem:[#allocation3 + $0x2] sm:$0xff]
    %v593 = vld [vmem:[#allocation3 + $0x3] sm:$0xff]
    %v594 = vld [vmem:[#allocation3 + $0x4] sm:$0xff]
    %596 = vrot.lane.b32.xlu0 %v591, 32
    %v597 = vpop.permute.xlu0 %596
    %600 = vrot.lane.b32.xlu0 %v592, 64
    %v601 = vpop.permute.xlu0 %600
    %604 = vrot.lane.b32.xlu0 %v593, 96
    %v605 = vpop.permute.xlu0 %604
    %v607 = vsel %vm93, %v590, %v597
    %v608 = vsel %vm132, %v607, %v601
    %v609 = vsel %vm135, %v608, %v605
    %v610 = vld [vmem:[#allocation10] sm:$0xff]
    %v611 = vld [vmem:[#allocation10 + $0x8] sm:$0xff]
    %v612 = vld [vmem:[#allocation10 + $0x10] sm:$0xff]
    %v613 = vld [vmem:[#allocation10 + $0x18] sm:$0xff]
    %v614 = vld [vmem:[#allocation10 + $0x20] sm:$0xff]
    %v615 = vld [vmem:[#allocation10 + $0x28] sm:$0xff]
    %v616 = vld [vmem:[#allocation10 + $0x30] sm:$0xff]
    %v617 = vld [vmem:[#allocation10 + $0x38] sm:$0xff]
    %v618 = vld [vmem:[#allocation10 + $0x40] sm:$0xff]
    %v619 = vld [vmem:[#allocation10 + $0x48] sm:$0xff]
    %v620 = vld [vmem:[#allocation10 + $0x50] sm:$0xff]
    %v621 = vld [vmem:[#allocation10 + $0x58] sm:$0xff]
    %v622 = vld [vmem:[#allocation10 + $0x60] sm:$0xff]
    %v623 = vld [vmem:[#allocation10 + $0x68] sm:$0xff]
    %v624 = vld [vmem:[#allocation10 + $0x70] sm:$0xff]
    %v625 = vld [vmem:[#allocation10 + $0x78] sm:$0xff]
    %v626 = vld [vmem:[#allocation10 + $0x80] sm:$0xff]
    %v627 = vld [vmem:[#allocation10 + $0x88] sm:$0xff]
    %v628 = vld [vmem:[#allocation10 + $0x90] sm:$0xff]
    %v629 = vld [vmem:[#allocation10 + $0x98] sm:$0xff]
    %v630 = vld [vmem:[%s8] sm:$0x1]
    %v632 = vlaneseq
    %v633 = vshrl.u32 %v632, 7
    %v634 = vsub.s32 0, %v633
    %v635 = vrot.slane %v630, %v634
    %v638 = vsel %vm93, %v594, 0
    %640 = vmatprep.subr.mxu0 0.0
    %641 = vmatpush1.msra.mxu0 %v610
    %642 = vmatprep.subr.mxu0 0.0
    %643 = vmatpush1.msra.mxu0 %v611
    %644 = vmatprep.subr.mxu0 0.0
    %645 = vmatpush1.msra.mxu0 %v612
    %646 = vmatprep.subr.mxu0 0.0
    %647 = vmatpush1.msra.mxu0 %v613
    %648 = vmatprep.subr.mxu0 0.0
    %649 = vmatpush1.msra.mxu0 %v614
    %650 = vmatprep.subr.mxu0 0.0
    %651 = vmatpush1.msra.mxu0 %v615
    %652 = vmatprep.subr.mxu0 0.0
    %653 = vmatpush1.msra.mxu0 %v616
    %654 = vmatprep.subr.mxu0 0.0
    %655 = vmatpush1.msra.mxu0 %v617
    %656 = vmatprep.subr.mxu0 0.0
    %657 = vmatpush1.msra.mxu0 %v618
    %658 = vmatprep.subr.mxu0 0.0
    %659 = vmatpush1.msra.mxu0 %v619
    %660 = vmatprep.subr.mxu0 0.0
    %661 = vmatpush1.msra.mxu0 %v620
    %662 = vmatprep.subr.mxu0 0.0
    %663 = vmatpush1.msra.mxu0 %v621
    %664 = vmatprep.subr.mxu0 0.0
    %665 = vmatpush1.msra.mxu0 %v622
    %666 = vmatprep.subr.mxu0 0.0
    %667 = vmatpush1.msra.mxu0 %v623
    %668 = vmatprep.subr.mxu0 0.0
    %669 = vmatpush1.msra.mxu0 %v624
    %670 = vmatprep.subr.mxu0 0.0
    %671 = vmatpush1.msra.mxu0 %v625
    %672 = vmatprep.subr.mxu0 0.0
    %673 = vmatpush1.msra.mxu0 %v626
    %674 = vmatprep.subr.mxu0 0.0
    %675 = vmatpush1.msra.mxu0 %v627
    %676 = vmatprep.subr.mxu0 0.0
    %677 = vmatpush1.msra.mxu0 %v628
    %678 = vmatprep.subr.mxu0 0.0
    %679 = vmatpush1.msra.mxu0 %v629
    %680 = vmatprep.subr.mxu0 0.0
    %681 = vmatpush1.msra.mxu0 0.0
    %682 = vmatprep.subr.mxu0 0.0
    %683 = vmatpush1.msra.mxu0 0.0
    %684 = vmatprep.subr.mxu0 0.0
    %685 = vmatpush1.msra.mxu0 0.0
    %686 = vmatprep.subr.mxu0 0.0
    %687 = vmatpush1.msra.mxu0 0.0
    %688 = vmatprep.subr.mxu0 0.0
    %689 = vmatpush1.msra.mxu0 0.0
    %690 = vmatprep.subr.mxu0 0.0
    %691 = vmatpush1.msra.mxu0 0.0
    %692 = vmatprep.subr.mxu0 0.0
    %693 = vmatpush1.msra.mxu0 0.0
    %694 = vmatprep.subr.mxu0 0.0
    %695 = vmatpush1.msra.mxu0 0.0
    %696 = vmatprep.subr.mxu0 0.0
    %697 = vmatpush1.msra.mxu0 0.0
    %698 = vmatprep.subr.mxu0 0.0
    %699 = vmatpush1.msra.mxu0 0.0
    %700 = vmatprep.subr.mxu0 0.0
    %701 = vmatpush1.msra.mxu0 0.0
    %702 = vmatprep.subr.mxu0 0.0
    %703 = vmatpush1.msra.mxu0 0.0
    %704 = vmatprep.mubr.f32.mxu0 %v638
    %705 = vmatmul.mubr.f32.gmra.mrb[0].mxu0 %v609
    %v706 = vpop.f32.mrb[0].mxu0
    %v707 = vadd.f32 %v635, %v706
    %v708 = vpop.f32.mrb[0].mxu0
    %709 = vdwg.mxu0
    %v710 = vmax.f32 %v707, 0.0
    %v711 = vsel %vm93, %v710, -inf
    %v712 = vrot.slane %v711, 4
    %v713 = vmax.f32 %v711, %v712
    %v714 = vrot.slane %v713, 2
    %v715 = vmax.f32 %v713, %v714
    %v716 = vrot.slane %v715, 1
    %v717 = vmax.f32 %v715, %v716
    %719 = vrot.lane.b32.xlu0 %v421, 32
    %v720 = vpop.permute.xlu0 %719
    %723 = vrot.lane.b32.xlu0 %v585, 64
    %v724 = vpop.permute.xlu0 %723
    %727 = vrot.lane.b32.xlu0 %v717, 96
    %v728 = vpop.permute.xlu0 %727
    %v730 = vsel %vm93, %v257, %v720
    %v731 = vsel %vm132, %v730, %v724
    %v732 = vsel %vm135, %v731, %v728
    %733 = vst [vmem:[#allocation12] sm:$0x1] %v732
    %s734 = scalar_lea.vmem %s0, 16
    %v735 = vld [vmem:[%s734] sm:$0xff]
    %v736 = vld [vmem:[%s734 + $0x8] sm:$0xff]
    %737 = vst.msk [vmem:[#allocation2] sm:$0x1] %vm90, 0.0
    %738 = vst.msk [vmem:[#allocation2 + $0x11] sm:$0x1] %vm90, 0.0
    %739 = vst.msk [vmem:[#allocation2 + $0x1] sm:$0xff] %vm93, %v735
    %740 = vst.msk [vmem:[#allocation2 + $0x9] sm:$0xff] %vm93, %v736
    %v741 = vld [vmem:[#allocation2] sm:$0xff]
    %v742 = vld [vmem:[#allocation2 + $0x8] sm:$0x3f]
    %v743 = vld [vmem:[#allocation2 + $0x1] sm:$0xff]
    %v744 = vld [vmem:[#allocation2 + $0x9] sm:$0x3f]
    %v745 = vld [vmem:[#allocation2 + $0x2] sm:$0xff]
    %v746 = vld [vmem:[#allocation2 + $0xa] sm:$0x3f]
    %v747 = vld [vmem:[#allocation2 + $0x3] sm:$0xff]
    %v748 = vld [vmem:[#allocation2 + $0xb] sm:$0x3f]
    %v749 = vld [vmem:[#allocation2 + $0x4] sm:$0xff]
    %v750 = vld [vmem:[#allocation2 + $0xc] sm:$0x3f]
    %753 = vrot.lane.b32.xlu0 %v743, 32
    %v754 = vpop.permute.xlu0 %753
    %755 = vrot.lane.b32.xlu0 %v744, 32
    %v756 = vpop.permute.xlu0 %755
    %761 = vrot.lane.b32.xlu0 %v745, 64
    %v762 = vpop.permute.xlu0 %761
    %763 = vrot.lane.b32.xlu0 %v746, 64
    %v764 = vpop.permute.xlu0 %763
    %769 = vrot.lane.b32.xlu0 %v747, 96
    %v770 = vpop.permute.xlu0 %769
    %771 = vrot.lane.b32.xlu0 %v748, 96
    %v772 = vpop.permute.xlu0 %771
    %v775 = vsel %vm93, %v741, %v754
    %v776 = vsel %vm93, %v742, %v756
    %v777 = vsel %vm132, %v775, %v762
    %v778 = vsel %vm132, %v776, %v764
    %v779 = vsel %vm135, %v777, %v770
    %v780 = vsel %vm135, %v778, %v772
    %v781 = vld [vmem:[#allocation4] sm:$0xff]
    %v782 = vld [vmem:[#allocation4 + $0x8] sm:$0xff]
    %v783 = vld [vmem:[#allocation4 + $0x10] sm:$0xff]
    %v784 = vld [vmem:[#allocation4 + $0x18] sm:$0xff]
    %v785 = vld [vmem:[#allocation4 + $0x20] sm:$0xff]
    %v786 = vld [vmem:[#allocation4 + $0x28] sm:$0xff]
    %v787 = vld [vmem:[#allocation4 + $0x30] sm:$0xff]
    %v788 = vld [vmem:[#allocation4 + $0x38] sm:$0xff]
    %v789 = vld [vmem:[#allocation4 + $0x40] sm:$0xff]
    %v790 = vld [vmem:[#allocation4 + $0x48] sm:$0xff]
    %v791 = vld [vmem:[#allocation4 + $0x50] sm:$0xff]
    %v792 = vld [vmem:[#allocation4 + $0x58] sm:$0xff]
    %v793 = vld [vmem:[#allocation4 + $0x60] sm:$0xff]
    %v794 = vld [vmem:[#allocation4 + $0x68] sm:$0xff]
    %v795 = vld [vmem:[#allocation4 + $0x70] sm:$0xff]
    %v796 = vld [vmem:[#allocation4 + $0x78] sm:$0xff]
    %v797 = vld [vmem:[#allocation4 + $0x80] sm:$0xff]
    %v798 = vld [vmem:[#allocation4 + $0x88] sm:$0xff]
    %v799 = vld [vmem:[#allocation4 + $0x90] sm:$0xff]
    %v800 = vld [vmem:[#allocation4 + $0x98] sm:$0xff]
    %v801 = vld [vmem:[%s2] sm:$0x1]
    %v803 = vlaneseq
    %v804 = vshrl.u32 %v803, 7
    %v805 = vsub.s32 0, %v804
    %v806 = vrot.slane %v801, %v805
    %v809 = vsel %vm93, %v749, 0
    %v812 = vsel %vm93, %v750, 0
    %814 = vmatprep.subr.mxu0 0.0
    %815 = vmatpush1.msra.mxu0 %v781
    %816 = vmatprep.subr.mxu0 0.0
    %817 = vmatpush1.msra.mxu0 %v782
    %818 = vmatprep.subr.mxu0 0.0
    %819 = vmatpush1.msra.mxu0 %v783
    %820 = vmatprep.subr.mxu0 0.0
    %821 = vmatpush1.msra.mxu0 %v784
    %822 = vmatprep.subr.mxu0 0.0
    %823 = vmatpush1.msra.mxu0 %v785
    %824 = vmatprep.subr.mxu0 0.0
    %825 = vmatpush1.msra.mxu0 %v786
    %826 = vmatprep.subr.mxu0 0.0
    %827 = vmatpush1.msra.mxu0 %v787
    %828 = vmatprep.subr.mxu0 0.0
    %829 = vmatpush1.msra.mxu0 %v788
    %830 = vmatprep.subr.mxu0 0.0
    %831 = vmatpush1.msra.mxu0 %v789
    %832 = vmatprep.subr.mxu0 0.0
    %833 = vmatpush1.msra.mxu0 %v790
    %834 = vmatprep.subr.mxu0 0.0
    %835 = vmatpush1.msra.mxu0 %v791
    %836 = vmatprep.subr.mxu0 0.0
    %837 = vmatpush1.msra.mxu0 %v792
    %838 = vmatprep.subr.mxu0 0.0
    %839 = vmatpush1.msra.mxu0 %v793
    %840 = vmatprep.subr.mxu0 0.0
    %841 = vmatpush1.msra.mxu0 %v794
    %842 = vmatprep.subr.mxu0 0.0
    %843 = vmatpush1.msra.mxu0 %v795
    %844 = vmatprep.subr.mxu0 0.0
    %845 = vmatpush1.msra.mxu0 %v796
    %846 = vmatprep.subr.mxu0 0.0
    %847 = vmatpush1.msra.mxu0 %v797
    %848 = vmatprep.subr.mxu0 0.0
    %849 = vmatpush1.msra.mxu0 %v798
    %850 = vmatprep.subr.mxu0 0.0
    %851 = vmatpush1.msra.mxu0 %v799
    %852 = vmatprep.subr.mxu0 0.0
    %853 = vmatpush1.msra.mxu0 %v800
    %854 = vmatprep.subr.mxu0 0.0
    %855 = vmatpush1.msra.mxu0 0.0
    %856 = vmatprep.subr.mxu0 0.0
    %857 = vmatpush1.msra.mxu0 0.0
    %858 = vmatprep.subr.mxu0 0.0
    %859 = vmatpush1.msra.mxu0 0.0
    %860 = vmatprep.subr.mxu0 0.0
    %861 = vmatpush1.msra.mxu0 0.0
    %862 = vmatprep.subr.mxu0 0.0
    %863 = vmatpush1.msra.mxu0 0.0
    %864 = vmatprep.subr.mxu0 0.0
    %865 = vmatpush1.msra.mxu0 0.0
    %866 = vmatprep.subr.mxu0 0.0
    %867 = vmatpush1.msra.mxu0 0.0
    %868 = vmatprep.subr.mxu0 0.0
    %869 = vmatpush1.msra.mxu0 0.0
    %870 = vmatprep.subr.mxu0 0.0
    %871 = vmatpush1.msra.mxu0 0.0
    %872 = vmatprep.subr.mxu0 0.0
    %873 = vmatpush1.msra.mxu0 0.0
    %874 = vmatprep.subr.mxu0 0.0
    %875 = vmatpush1.msra.mxu0 0.0
    %876 = vmatprep.subr.mxu0 0.0
    %877 = vmatpush1.msra.mxu0 0.0
    %878 = vmatprep.mubr.f32.mxu0 %v809
    %879 = vmatmul.mubr.f32.gmra.mrb[0].mxu0 %v779
    %v880 = vpop.f32.mrb[0].mxu0
    %v881 = vadd.f32 %v806, %v880
    %v882 = vpop.f32.mrb[0].mxu0
    %883 = vmatprep.mubr.f32.mxu0 %v812
    %884 = vmatmul.mubr.f32.gmra.mrb[0].mxu0 %v780
    %v885 = vpop.f32.mrb[0].mxu0
    %v886 = vadd.f32 %v806, %v885
    %v887 = vpop.f32.mrb[0].mxu0
    %888 = vdwg.mxu0
    %v889 = vmax.f32 %v881, 0.0
    %v890 = vmax.f32 %v886, 0.0
    %v891 = vsel %vm93, %v889, -inf
    %v892 = vsel %vm249, %v890, -inf
    %v893 = vmax.f32 %v891, %v892
    %v894 = vrot.slane %v893, 4
    %v895 = vmax.f32 %v893, %v894
    %v896 = vrot.slane %v895, 2
    %v897 = vmax.f32 %v895, %v896
    %v898 = vrot.slane %v897, 1
    %v899 = vmax.f32 %v897, %v898
    %900 = vst.msk [vmem:[#allocation3] sm:$0x1] %vm90, 0.0
    %901 = vst.msk [vmem:[#allocation3 + $0xf] sm:$0x1] %vm90, 0.0
    %902 = vst.msk [vmem:[#allocation3 + $0x1] sm:$0xff] %vm93, %v889
    %903 = vst.msk [vmem:[#allocation3 + $0x9] sm:$0x3f] %vm249, %v890
    %v904 = vld [vmem:[#allocation3] sm:$0xff]
    %v905 = vld [vmem:[#allocation3 + $0x8] sm:$0xf]
    %v906 = vld [vmem:[#allocation3 + $0x1] sm:$0xff]
    %v907 = vld [vmem:[#allocation3 + $0x9] sm:$0xf]
    %v908 = vld [vmem:[#allocation3 + $0x2] sm:$0xff]
    %v909 = vld [vmem:[#allocation3 + $0xa] sm:$0xf]
    %v910 = vld [vmem:[#allocation3 + $0x3] sm:$0xff]
    %v911 = vld [vmem:[#allocation3 + $0xb] sm:$0xf]
    %v912 = vld [vmem:[#allocation3 + $0x4] sm:$0xff]
    %v913 = vld [vmem:[#allocation3 + $0xc] sm:$0xf]
    %916 = vrot.lane.b32.xlu0 %v906, 32
    %v917 = vpop.permute.xlu0 %916
    %918 = vrot.lane.b32.xlu0 %v907, 32
    %v919 = vpop.permute.xlu0 %918
    %924 = vrot.lane.b32.xlu0 %v908, 64
    %v925 = vpop.permute.xlu0 %924
    %926 = vrot.lane.b32.xlu0 %v909, 64
    %v927 = vpop.permute.xlu0 %926
    %932 = vrot.lane.b32.xlu0 %v910, 96
    %v933 = vpop.permute.xlu0 %932
    %934 = vrot.lane.b32.xlu0 %v911, 96
    %v935 = vpop.permute.xlu0 %934
    %v938 = vsel %vm93, %v904, %v917
    %v939 = vsel %vm93, %v905, %v919
    %v940 = vsel %vm132, %v938, %v925
    %v941 = vsel %vm132, %v939, %v927
    %v942 = vsel %vm135, %v940, %v933
    %v943 = vsel %vm135, %v941, %v935
    %v944 = vld [vmem:[#allocation7] sm:$0xff]
    %v945 = vld [vmem:[#allocation7 + $0x8] sm:$0xff]
    %v946 = vld [vmem:[#allocation7 + $0x10] sm:$0xff]
    %v947 = vld [vmem:[#allocation7 + $0x18] sm:$0xff]
    %v948 = vld [vmem:[#allocation7 + $0x20] sm:$0xff]
    %v949 = vld [vmem:[#allocation7 + $0x28] sm:$0xff]
    %v950 = vld [vmem:[#allocation7 + $0x30] sm:$0xff]
    %v951 = vld [vmem:[#allocation7 + $0x38] sm:$0xff]
    %v952 = vld [vmem:[#allocation7 + $0x40] sm:$0xff]
    %v953 = vld [vmem:[#allocation7 + $0x48] sm:$0xff]
    %v954 = vld [vmem:[#allocation7 + $0x50] sm:$0xff]
    %v955 = vld [vmem:[#allocation7 + $0x58] sm:$0xff]
    %v956 = vld [vmem:[#allocation7 + $0x60] sm:$0xff]
    %v957 = vld [vmem:[#allocation7 + $0x68] sm:$0xff]
    %v958 = vld [vmem:[#allocation7 + $0x70] sm:$0xff]
    %v959 = vld [vmem:[#allocation7 + $0x78] sm:$0xff]
    %v960 = vld [vmem:[#allocation7 + $0x80] sm:$0xff]
    %v961 = vld [vmem:[#allocation7 + $0x88] sm:$0xff]
    %v962 = vld [vmem:[#allocation7 + $0x90] sm:$0xff]
    %v963 = vld [vmem:[#allocation7 + $0x98] sm:$0xff]
    %v964 = vld [vmem:[%s4] sm:$0x1]
    %v966 = vlaneseq
    %v967 = vshrl.u32 %v966, 7
    %v968 = vsub.s32 0, %v967
    %v969 = vrot.slane %v964, %v968
    %v972 = vsel %vm93, %v912, 0
    %v975 = vsel %vm93, %v913, 0
    %977 = vmatprep.subr.mxu0 0.0
    %978 = vmatpush1.msra.mxu0 %v944
    %979 = vmatprep.subr.mxu0 0.0
    %980 = vmatpush1.msra.mxu0 %v945
    %981 = vmatprep.subr.mxu0 0.0
    %982 = vmatpush1.msra.mxu0 %v946
    %983 = vmatprep.subr.mxu0 0.0
    %984 = vmatpush1.msra.mxu0 %v947
    %985 = vmatprep.subr.mxu0 0.0
    %986 = vmatpush1.msra.mxu0 %v948
    %987 = vmatprep.subr.mxu0 0.0
    %988 = vmatpush1.msra.mxu0 %v949
    %989 = vmatprep.subr.mxu0 0.0
    %990 = vmatpush1.msra.mxu0 %v950
    %991 = vmatprep.subr.mxu0 0.0
    %992 = vmatpush1.msra.mxu0 %v951
    %993 = vmatprep.subr.mxu0 0.0
    %994 = vmatpush1.msra.mxu0 %v952
    %995 = vmatprep.subr.mxu0 0.0
    %996 = vmatpush1.msra.mxu0 %v953
    %997 = vmatprep.subr.mxu0 0.0
    %998 = vmatpush1.msra.mxu0 %v954
    %999 = vmatprep.subr.mxu0 0.0
    %1000 = vmatpush1.msra.mxu0 %v955
    %1001 = vmatprep.subr.mxu0 0.0
    %1002 = vmatpush1.msra.mxu0 %v956
    %1003 = vmatprep.subr.mxu0 0.0
    %1004 = vmatpush1.msra.mxu0 %v957
    %1005 = vmatprep.subr.mxu0 0.0
    %1006 = vmatpush1.msra.mxu0 %v958
    %1007 = vmatprep.subr.mxu0 0.0
    %1008 = vmatpush1.msra.mxu0 %v959
    %1009 = vmatprep.subr.mxu0 0.0
    %1010 = vmatpush1.msra.mxu0 %v960
    %1011 = vmatprep.subr.mxu0 0.0
    %1012 = vmatpush1.msra.mxu0 %v961
    %1013 = vmatprep.subr.mxu0 0.0
    %1014 = vmatpush1.msra.mxu0 %v962
    %1015 = vmatprep.subr.mxu0 0.0
    %1016 = vmatpush1.msra.mxu0 %v963
    %1017 = vmatprep.subr.mxu0 0.0
    %1018 = vmatpush1.msra.mxu0 0.0
    %1019 = vmatprep.subr.mxu0 0.0
    %1020 = vmatpush1.msra.mxu0 0.0
    %1021 = vmatprep.subr.mxu0 0.0
    %1022 = vmatpush1.msra.mxu0 0.0
    %1023 = vmatprep.subr.mxu0 0.0
    %1024 = vmatpush1.msra.mxu0 0.0
    %1025 = vmatprep.subr.mxu0 0.0
    %1026 = vmatpush1.msra.mxu0 0.0
    %1027 = vmatprep.subr.mxu0 0.0
    %1028 = vmatpush1.msra.mxu0 0.0
    %1029 = vmatprep.subr.mxu0 0.0
    %1030 = vmatpush1.msra.mxu0 0.0
    %1031 = vmatprep.subr.mxu0 0.0
    %1032 = vmatpush1.msra.mxu0 0.0
    %1033 = vmatprep.subr.mxu0 0.0
    %1034 = vmatpush1.msra.mxu0 0.0
    %1035 = vmatprep.subr.mxu0 0.0
    %1036 = vmatpush1.msra.mxu0 0.0
    %1037 = vmatprep.subr.mxu0 0.0
    %1038 = vmatpush1.msra.mxu0 0.0
    %1039 = vmatprep.subr.mxu0 0.0
    %1040 = vmatpush1.msra.mxu0 0.0
    %1041 = vmatprep.mubr.f32.mxu0 %v972
    %1042 = vmatmul.mubr.f32.gmra.mrb[0].mxu0 %v942
    %v1043 = vpop.f32.mrb[0].mxu0
    %v1044 = vadd.f32 %v969, %v1043
    %v1045 = vpop.f32.mrb[0].mxu0
    %1046 = vmatprep.mubr.f32.mxu0 %v975
    %1047 = vmatmul.mubr.f32.gmra.mrb[0].mxu0 %v943
    %v1048 = vpop.f32.mrb[0].mxu0
    %v1049 = vadd.f32 %v969, %v1048
    %v1050 = vpop.f32.mrb[0].mxu0
    %1051 = vdwg.mxu0
    %v1052 = vmax.f32 %v1044, 0.0
    %v1053 = vmax.f32 %v1049, 0.0
    %v1054 = vsel %vm93, %v1052, -inf
    %v1055 = vsel %vm413, %v1053, -inf
    %v1056 = vmax.f32 %v1054, %v1055
    %v1057 = vrot.slane %v1056, 4
    %v1058 = vmax.f32 %v1056, %v1057
    %v1059 = vrot.slane %v1058, 2
    %v1060 = vmax.f32 %v1058, %v1059
    %v1061 = vrot.slane %v1060, 1
    %v1062 = vmax.f32 %v1060, %v1061
    %1063 = vst.msk [vmem:[#allocation3] sm:$0x1] %vm90, 0.0
    %1064 = vst.msk [vmem:[#allocation3 + $0xd] sm:$0x1] %vm90, 0.0
    %1065 = vst.msk [vmem:[#allocation3 + $0x1] sm:$0xff] %vm93, %v1052
    %1066 = vst.msk [vmem:[#allocation3 + $0x9] sm:$0xf] %vm413, %v1053
    %v1067 = vld [vmem:[#allocation3] sm:$0xff]
    %v1068 = vld [vmem:[#allocation3 + $0x8] sm:$0x3]
    %v1069 = vld [vmem:[#allocation3 + $0x1] sm:$0xff]
    %v1070 = vld [vmem:[#allocation3 + $0x9] sm:$0x3]
    %v1071 = vld [vmem:[#allocation3 + $0x2] sm:$0xff]
    %v1072 = vld [vmem:[#allocation3 + $0xa] sm:$0x3]
    %v1073 = vld [vmem:[#allocation3 + $0x3] sm:$0xff]
    %v1074 = vld [vmem:[#allocation3 + $0xb] sm:$0x3]
    %v1075 = vld [vmem:[#allocation3 + $0x4] sm:$0xff]
    %v1076 = vld [vmem:[#allocation3 + $0xc] sm:$0x3]
    %1079 = vrot.lane.b32.xlu0 %v1069, 32
    %v1080 = vpop.permute.xlu0 %1079
    %1081 = vrot.lane.b32.xlu0 %v1070, 32
    %v1082 = vpop.permute.xlu0 %1081
    %1087 = vrot.lane.b32.xlu0 %v1071, 64
    %v1088 = vpop.permute.xlu0 %1087
    %1089 = vrot.lane.b32.xlu0 %v1072, 64
    %v1090 = vpop.permute.xlu0 %1089
    %1095 = vrot.lane.b32.xlu0 %v1073, 96
    %v1096 = vpop.permute.xlu0 %1095
    %1097 = vrot.lane.b32.xlu0 %v1074, 96
    %v1098 = vpop.permute.xlu0 %1097
    %v1101 = vsel %vm93, %v1067, %v1080
    %v1102 = vsel %vm93, %v1068, %v1082
    %v1103 = vsel %vm132, %v1101, %v1088
    %v1104 = vsel %vm132, %v1102, %v1090
    %v1105 = vsel %vm135, %v1103, %v1096
    %v1106 = vsel %vm135, %v1104, %v1098
    %v1107 = vld [vmem:[#allocation9] sm:$0xff]
    %v1108 = vld [vmem:[#allocation9 + $0x8] sm:$0xff]
    %v1109 = vld [vmem:[#allocation9 + $0x10] sm:$0xff]
    %v1110 = vld [vmem:[#allocation9 + $0x18] sm:$0xff]
    %v1111 = vld [vmem:[#allocation9 + $0x20] sm:$0xff]
    %v1112 = vld [vmem:[#allocation9 + $0x28] sm:$0xff]
    %v1113 = vld [vmem:[#allocation9 + $0x30] sm:$0xff]
    %v1114 = vld [vmem:[#allocation9 + $0x38] sm:$0xff]
    %v1115 = vld [vmem:[#allocation9 + $0x40] sm:$0xff]
    %v1116 = vld [vmem:[#allocation9 + $0x48] sm:$0xff]
    %v1117 = vld [vmem:[#allocation9 + $0x50] sm:$0xff]
    %v1118 = vld [vmem:[#allocation9 + $0x58] sm:$0xff]
    %v1119 = vld [vmem:[#allocation9 + $0x60] sm:$0xff]
    %v1120 = vld [vmem:[#allocation9 + $0x68] sm:$0xff]
    %v1121 = vld [vmem:[#allocation9 + $0x70] sm:$0xff]
    %v1122 = vld [vmem:[#allocation9 + $0x78] sm:$0xff]
    %v1123 = vld [vmem:[#allocation9 + $0x80] sm:$0xff]
    %v1124 = vld [vmem:[#allocation9 + $0x88] sm:$0xff]
    %v1125 = vld [vmem:[#allocation9 + $0x90] sm:$0xff]
    %v1126 = vld [vmem:[#allocation9 + $0x98] sm:$0xff]
    %v1127 = vld [vmem:[%s6] sm:$0x1]
    %v1129 = vlaneseq
    %v1130 = vshrl.u32 %v1129, 7
    %v1131 = vsub.s32 0, %v1130
    %v1132 = vrot.slane %v1127, %v1131
    %v1135 = vsel %vm93, %v1075, 0
    %v1138 = vsel %vm93, %v1076, 0
    %1140 = vmatprep.subr.mxu0 0.0
    %1141 = vmatpush1.msra.mxu0 %v1107
    %1142 = vmatprep.subr.mxu0 0.0
    %1143 = vmatpush1.msra.mxu0 %v1108
    %1144 = vmatprep.subr.mxu0 0.0
    %1145 = vmatpush1.msra.mxu0 %v1109
    %1146 = vmatprep.subr.mxu0 0.0
    %1147 = vmatpush1.msra.mxu0 %v1110
    %1148 = vmatprep.subr.mxu0 0.0
    %1149 = vmatpush1.msra.mxu0 %v1111
    %1150 = vmatprep.subr.mxu0 0.0
    %1151 = vmatpush1.msra.mxu0 %v1112
    %1152 = vmatprep.subr.mxu0 0.0
    %1153 = vmatpush1.msra.mxu0 %v1113
    %1154 = vmatprep.subr.mxu0 0.0
    %1155 = vmatpush1.msra.mxu0 %v1114
    %1156 = vmatprep.subr.mxu0 0.0
    %1157 = vmatpush1.msra.mxu0 %v1115
    %1158 = vmatprep.subr.mxu0 0.0
    %1159 = vmatpush1.msra.mxu0 %v1116
    %1160 = vmatprep.subr.mxu0 0.0
    %1161 = vmatpush1.msra.mxu0 %v1117
    %1162 = vmatprep.subr.mxu0 0.0
    %1163 = vmatpush1.msra.mxu0 %v1118
    %1164 = vmatprep.subr.mxu0 0.0
    %1165 = vmatpush1.msra.mxu0 %v1119
    %1166 = vmatprep.subr.mxu0 0.0
    %1167 = vmatpush1.msra.mxu0 %v1120
    %1168 = vmatprep.subr.mxu0 0.0
    %1169 = vmatpush1.msra.mxu0 %v1121
    %1170 = vmatprep.subr.mxu0 0.0
    %1171 = vmatpush1.msra.mxu0 %v1122
    %1172 = vmatprep.subr.mxu0 0.0
    %1173 = vmatpush1.msra.mxu0 %v1123
    %1174 = vmatprep.subr.mxu0 0.0
    %1175 = vmatpush1.msra.mxu0 %v1124
    %1176 = vmatprep.subr.mxu0 0.0
    %1177 = vmatpush1.msra.mxu0 %v1125
    %1178 = vmatprep.subr.mxu0 0.0
    %1179 = vmatpush1.msra.mxu0 %v1126
    %1180 = vmatprep.subr.mxu0 0.0
    %1181 = vmatpush1.msra.mxu0 0.0
    %1182 = vmatprep.subr.mxu0 0.0
    %1183 = vmatpush1.msra.mxu0 0.0
    %1184 = vmatprep.subr.mxu0 0.0
    %1185 = vmatpush1.msra.mxu0 0.0
    %1186 = vmatprep.subr.mxu0 0.0
    %1187 = vmatpush1.msra.mxu0 0.0
    %1188 = vmatprep.subr.mxu0 0.0
    %1189 = vmatpush1.msra.mxu0 0.0
    %1190 = vmatprep.subr.mxu0 0.0
    %1191 = vmatpush1.msra.mxu0 0.0
    %1192 = vmatprep.subr.mxu0 0.0
    %1193 = vmatpush1.msra.mxu0 0.0
    %1194 = vmatprep.subr.mxu0 0.0
    %1195 = vmatpush1.msra.mxu0 0.0
    %1196 = vmatprep.subr.mxu0 0.0
    %1197 = vmatpush1.msra.mxu0 0.0
    %1198 = vmatprep.subr.mxu0 0.0
    %1199 = vmatpush1.msra.mxu0 0.0
    %1200 = vmatprep.subr.mxu0 0.0
    %1201 = vmatpush1.msra.mxu0 0.0
    %1202 = vmatprep.subr.mxu0 0.0
    %1203 = vmatpush1.msra.mxu0 0.0
    %1204 = vmatprep.mubr.f32.mxu0 %v1135
    %1205 = vmatmul.mubr.f32.gmra.mrb[0].mxu0 %v1105
    %v1206 = vpop.f32.mrb[0].mxu0
    %v1207 = vadd.f32 %v1132, %v1206
    %v1208 = vpop.f32.mrb[0].mxu0
    %1209 = vmatprep.mubr.f32.mxu0 %v1138
    %1210 = vmatmul.mubr.f32.gmra.mrb[0].mxu0 %v1106
    %v1211 = vpop.f32.mrb[0].mxu0
    %v1212 = vadd.f32 %v1132, %v1211
    %v1213 = vpop.f32.mrb[0].mxu0
    %1214 = vdwg.mxu0
    %v1215 = vmax.f32 %v1207, 0.0
    %v1216 = vmax.f32 %v1212, 0.0
    %v1217 = vsel %vm93, %v1215, -inf
    %v1218 = vsel %vm577, %v1216, -inf
    %v1219 = vmax.f32 %v1217, %v1218
    %v1220 = vrot.slane %v1219, 4
    %v1221 = vmax.f32 %v1219, %v1220
    %v1222 = vrot.slane %v1221, 2
    %v1223 = vmax.f32 %v1221, %v1222
    %v1224 = vrot.slane %v1223, 1
    %v1225 = vmax.f32 %v1223, %v1224
    %1226 = vst.msk [vmem:[#allocation3] sm:$0x1] %vm90, 0.0
    %1227 = vst.msk [vmem:[#allocation3 + $0xb] sm:$0x1] %vm90, 0.0
    %1228 = vst.msk [vmem:[#allocation3 + $0x1] sm:$0xff] %vm93, %v1215
    %1229 = vst.msk [vmem:[#allocation3 + $0x9] sm:$0x3] %vm577, %v1216
    %v1230 = vld [vmem:[#allocation3] sm:$0xff]
    %v1231 = vld [vmem:[#allocation3 + $0x1] sm:$0xff]
    %v1232 = vld [vmem:[#allocation3 + $0x2] sm:$0xff]
    %v1233 = vld [vmem:[#allocation3 + $0x3] sm:$0xff]
    %v1234 = vld [vmem:[#allocation3 + $0x4] sm:$0xff]
    %1236 = vrot.lane.b32.xlu0 %v1231, 32
    %v1237 = vpop.permute.xlu0 %1236
    %1240 = vrot.lane.b32.xlu0 %v1232, 64
    %v1241 = vpop.permute.xlu0 %1240
    %1244 = vrot.lane.b32.xlu0 %v1233, 96
    %v1245 = vpop.permute.xlu0 %1244
    %v1247 = vsel %vm93, %v1230, %v1237
    %v1248 = vsel %vm132, %v1247, %v1241
    %v1249 = vsel %vm135, %v1248, %v1245
    %v1250 = vld [vmem:[#allocation10] sm:$0xff]
    %v1251 = vld [vmem:[#allocation10 + $0x8] sm:$0xff]
    %v1252 = vld [vmem:[#allocation10 + $0x10] sm:$0xff]
    %v1253 = vld [vmem:[#allocation10 + $0x18] sm:$0xff]
    %v1254 = vld [vmem:[#allocation10 + $0x20] sm:$0xff]
    %v1255 = vld [vmem:[#allocation10 + $0x28] sm:$0xff]
    %v1256 = vld [vmem:[#allocation10 + $0x30] sm:$0xff]
    %v1257 = vld [vmem:[#allocation10 + $0x38] sm:$0xff]
    %v1258 = vld [vmem:[#allocation10 + $0x40] sm:$0xff]
    %v1259 = vld [vmem:[#allocation10 + $0x48] sm:$0xff]
    %v1260 = vld [vmem:[#allocation10 + $0x50] sm:$0xff]
    %v1261 = vld [vmem:[#allocation10 + $0x58] sm:$0xff]
    %v1262 = vld [vmem:[#allocation10 + $0x60] sm:$0xff]
    %v1263 = vld [vmem:[#allocation10 + $0x68] sm:$0xff]
    %v1264 = vld [vmem:[#allocation10 + $0x70] sm:$0xff]
    %v1265 = vld [vmem:[#allocation10 + $0x78] sm:$0xff]
    %v1266 = vld [vmem:[#allocation10 + $0x80] sm:$0xff]
    %v1267 = vld [vmem:[#allocation10 + $0x88] sm:$0xff]
    %v1268 = vld [vmem:[#allocation10 + $0x90] sm:$0xff]
    %v1269 = vld [vmem:[#allocation10 + $0x98] sm:$0xff]
    %v1270 = vld [vmem:[%s8] sm:$0x1]
    %v1272 = vlaneseq
    %v1273 = vshrl.u32 %v1272, 7
    %v1274 = vsub.s32 0, %v1273
    %v1275 = vrot.slane %v1270, %v1274
    %v1278 = vsel %vm93, %v1234, 0
    %1280 = vmatprep.subr.mxu0 0.0
    %1281 = vmatpush1.msra.mxu0 %v1250
    %1282 = vmatprep.subr.mxu0 0.0
    %1283 = vmatpush1.msra.mxu0 %v1251
    %1284 = vmatprep.subr.mxu0 0.0
    %1285 = vmatpush1.msra.mxu0 %v1252
    %1286 = vmatprep.subr.mxu0 0.0
    %1287 = vmatpush1.msra.mxu0 %v1253
    %1288 = vmatprep.subr.mxu0 0.0
    %1289 = vmatpush1.msra.mxu0 %v1254
    %1290 = vmatprep.subr.mxu0 0.0
    %1291 = vmatpush1.msra.mxu0 %v1255
    %1292 = vmatprep.subr.mxu0 0.0
    %1293 = vmatpush1.msra.mxu0 %v1256
    %1294 = vmatprep.subr.mxu0 0.0
    %1295 = vmatpush1.msra.mxu0 %v1257
    %1296 = vmatprep.subr.mxu0 0.0
    %1297 = vmatpush1.msra.mxu0 %v1258
    %1298 = vmatprep.subr.mxu0 0.0
    %1299 = vmatpush1.msra.mxu0 %v1259
    %1300 = vmatprep.subr.mxu0 0.0
    %1301 = vmatpush1.msra.mxu0 %v1260
    %1302 = vmatprep.subr.mxu0 0.0
    %1303 = vmatpush1.msra.mxu0 %v1261
    %1304 = vmatprep.subr.mxu0 0.0
    %1305 = vmatpush1.msra.mxu0 %v1262
    %1306 = vmatprep.subr.mxu0 0.0
    %1307 = vmatpush1.msra.mxu0 %v1263
    %1308 = vmatprep.subr.mxu0 0.0
    %1309 = vmatpush1.msra.mxu0 %v1264
    %1310 = vmatprep.subr.mxu0 0.0
    %1311 = vmatpush1.msra.mxu0 %v1265
    %1312 = vmatprep.subr.mxu0 0.0
    %1313 = vmatpush1.msra.mxu0 %v1266
    %1314 = vmatprep.subr.mxu0 0.0
    %1315 = vmatpush1.msra.mxu0 %v1267
    %1316 = vmatprep.subr.mxu0 0.0
    %1317 = vmatpush1.msra.mxu0 %v1268
    %1318 = vmatprep.subr.mxu0 0.0
    %1319 = vmatpush1.msra.mxu0 %v1269
    %1320 = vmatprep.subr.mxu0 0.0
    %1321 = vmatpush1.msra.mxu0 0.0
    %1322 = vmatprep.subr.mxu0 0.0
    %1323 = vmatpush1.msra.mxu0 0.0
    %1324 = vmatprep.subr.mxu0 0.0
    %1325 = vmatpush1.msra.mxu0 0.0
    %1326 = vmatprep.subr.mxu0 0.0
    %1327 = vmatpush1.msra.mxu0 0.0
    %1328 = vmatprep.subr.mxu0 0.0
    %1329 = vmatpush1.msra.mxu0 0.0
    %1330 = vmatprep.subr.mxu0 0.0
    %1331 = vmatpush1.msra.mxu0 0.0
    %1332 = vmatprep.subr.mxu0 0.0
    %1333 = vmatpush1.msra.mxu0 0.0
    %1334 = vmatprep.subr.mxu0 0.0
    %1335 = vmatpush1.msra.mxu0 0.0
    %1336 = vmatprep.subr.mxu0 0.0
    %1337 = vmatpush1.msra.mxu0 0.0
    %1338 = vmatprep.subr.mxu0 0.0
    %1339 = vmatpush1.msra.mxu0 0.0
    %1340 = vmatprep.subr.mxu0 0.0
    %1341 = vmatpush1.msra.mxu0 0.0
    %1342 = vmatprep.subr.mxu0 0.0
    %1343 = vmatpush1.msra.mxu0 0.0
    %1344 = vmatprep.mubr.f32.mxu0 %v1278
    %1345 = vmatmul.mubr.f32.gmra.mrb[0].mxu0 %v1249
    %v1346 = vpop.f32.mrb[0].mxu0
    %v1347 = vadd.f32 %v1275, %v1346
    %v1348 = vpop.f32.mrb[0].mxu0
    %1349 = vdwg.mxu0
    %v1350 = vmax.f32 %v1347, 0.0
    %v1351 = vsel %vm93, %v1350, -inf
    %v1352 = vrot.slane %v1351, 4
    %v1353 = vmax.f32 %v1351, %v1352
    %v1354 = vrot.slane %v1353, 2
    %v1355 = vmax.f32 %v1353, %v1354
    %v1356 = vrot.slane %v1355, 1
    %v1357 = vmax.f32 %v1355, %v1356
    %1359 = vrot.lane.b32.xlu0 %v1062, 32
    %v1360 = vpop.permute.xlu0 %1359
    %1363 = vrot.lane.b32.xlu0 %v1225, 64
    %v1364 = vpop.permute.xlu0 %1363
    %1367 = vrot.lane.b32.xlu0 %v1357, 96
    %v1368 = vpop.permute.xlu0 %1367
    %v1370 = vsel %vm93, %v899, %v1360
    %v1371 = vsel %vm132, %v1370, %v1364
    %v1372 = vsel %vm135, %v1371, %v1368
    %1373 = vst [vmem:[#allocation12 + $0x1] sm:$0x1] %v1372
    // Predicated region
    $region54: #{convnet_encoder3.1} parent=1 // pred_check
      _
    $region55: #{convnet_encoder3.1} parent=1 // pred_check_branch
      %1375 = sbr.rel (0) target = $region57
    $region56: #{convnet_encoder3.1} parent=1 // pred_region
      %s1377 = ssub.s32 32, 32
      %1378 = vsyncadd [#allocation6], %s1377
      %s1380 = sshll.u32 [#allocation12], 4
      %s1381 = int_to_ptr.vmem [resolvable:$true] %s1380
      %1383 = dma.vmem_to_hbm [thread:$0]  %s1381, 32, %s9, [#allocation6]
    $region57: #{convnet_encoder3.1} parent=1 // pred_fallthru
      _
    // Predicated region
    $region58: #{convnet_encoder3.1} parent=1 // pred_check
      _
    $region59: #{convnet_encoder3.1} parent=1 // pred_check_branch
      %1385 = sbr.rel (0) target = $region61
    $region60: #{convnet_encoder3.1} parent=1 // pred_region
      %1386 = dma.done [#allocation6], 32
    $region61: #{convnet_encoder3.1} parent=1 // pred_fallthru
      _
    %1387 = vsyncpa [#allocation5], 1
    %1388 = vsyncpa [#allocation8], 1
    %1389 = vsyncpa [#allocation11], 1
    %1390 = vsyncpa [#allocation6], 1

</llo_original>
